<compile_context>
chip_gen: v5e
topology: v5e:2x2
jax: 0.10.0
libtpu: 0.0.40
codegen_flags: <defaults>
</compile_context>

<pallas_src>
import jax
import jax.numpy as jnp
from jax.experimental import pallas as pl
from jax.experimental.pallas import tpu as pltpu


def _round_up(n, m):
    return ((n + m - 1) // m) * m


def gru_kernel(nact_ref, xw_ref, whh_ref, bhn_ref, out_ref, hfin_ref, h_scr):
    """One grid step == T_BLK time steps of the GRU recurrence for one batch block.

    nact_ref : (T_pad,) int32 SMEM   number of active rows at each time step
    xw_ref   : (T_BLK, B_BLK, 3*H_pad) f32   precomputed x@W_ih + folded biases
    whh_ref  : (H_pad, 3*H_pad) bf16         fused recurrent weights (r|z|n)
    bhn_ref  : (1, H_pad) f32                recurrent bias of the n gate
    out_ref  : (T_BLK, B_BLK, H_pad) f32     output rows for this time block
    hfin_ref : (B_BLK, H_pad) f32            final hidden state (written at last tb)
    h_scr    : (B_BLK, H_pad) f32 VMEM       recurrent hidden state carry
    """
    bb = pl.program_id(0)
    tb = pl.program_id(1)
    t_blk, b_blk, _ = xw_ref.shape
    h_pad = h_scr.shape[-1]

    @pl.when(tb == 0)
    def _():
        h_scr[...] = jnp.zeros_like(h_scr)

    # Hoisted out of the per-step loop: weights, n-gate bias, global row ids.
    whh = whh_ref[...]                                              # (H_pad, 3*H_pad)
    bhn = bhn_ref[...]                                              # (1, H_pad)
    row_ids = jax.lax.broadcasted_iota(jnp.int32, (b_blk, 1), 0) + bb * b_blk

    count0 = nact_ref[tb * t_blk]   # active rows at the first step of this block

    @pl.when(count0 == 0)           # whole block is past every sequence end
    def _():
        out_ref[...] = jnp.zeros_like(out_ref)

    @pl.when(count0 > 0)
    def _():
        def step(i, h):
            t = tb * t_blk + i
            xg = xw_ref[i]                                          # (B_BLK, 3*H_pad)
            hg = jnp.dot(h.astype(jnp.bfloat16), whh,
                         preferred_element_type=jnp.float32)        # (B_BLK, 3*H_pad)
            r = jax.nn.sigmoid(xg[:, :h_pad] + hg[:, :h_pad])
            z = jax.nn.sigmoid(xg[:, h_pad:2 * h_pad] + hg[:, h_pad:2 * h_pad])
            n = jnp.tanh(xg[:, 2 * h_pad:] + r * (hg[:, 2 * h_pad:] + bhn))
            h_new = (1.0 - z) * n + z * h
            mask = row_ids < nact_ref[t]                            # (B_BLK, 1)
            out_ref[i] = jnp.where(mask, h_new, 0.0).astype(out_ref.dtype)
            return jnp.where(mask, h_new, h)

        h_scr[...] = jax.lax.fori_loop(0, t_blk, step, h_scr[...], unroll=True)

    @pl.when(tb == pl.num_programs(1) - 1)
    def _():
        hfin_ref[...] = h_scr[...].astype(hfin_ref.dtype)


def augmented_gru(x, batch_lengths, w_ih, w_hh, b_ih, b_hh, *, t_blk=16, b_blk=None):
    """x: (T, B, I) time-major f32; batch_lengths: (B,) int32 sorted descending.

    Weights are stacked per gate (r, z, n):
      w_ih (3, I, H), w_hh (3, H, H), b_ih (3, 1, H), b_hh (3, 1, H)
      (transposed PyTorch GRUCell weight chunks).
    Returns (output[T, B, H], final_hidden[1, B, H]).
    """
    T, B, I = x.shape
    H = w_hh.shape[-1]
    f32 = jnp.float32

    H_pad = _round_up(H, 128)
    if b_blk is None:
        b_blk = min(_round_up(B, 8), 128)
    b_blk = _round_up(b_blk, 8)
    B_pad = _round_up(B, b_blk)
    t_blk = max(1, min(t_blk, T))
    T_pad = _round_up(T, t_blk)
    nb = B_pad // b_blk
    nt = T_pad // t_blk

    def pad_last(a, target):
        return jnp.pad(a, [(0, 0)] * (a.ndim - 1) + [(0, target - a.shape[-1])])

    # ---- hoisted input projection: one large matmul over all time steps ------
    w_ih_f = jnp.concatenate([w_ih[0], w_ih[1], w_ih[2]], axis=-1).astype(f32)   # (I, 3H)
    # fold b_ih (all gates) and b_hh (r, z gates) into the precomputed gates
    bias_x = jnp.concatenate(
        [b_ih[0] + b_hh[0], b_ih[1] + b_hh[1], b_ih[2]], axis=-1).astype(f32)    # (1, 3H)
    xw = jnp.dot(x.reshape(T * B, I).astype(f32), w_ih_f,
                 preferred_element_type=f32) + bias_x                            # (T*B, 3H)
    xw = jnp.concatenate(
        [pad_last(xw[:, g * H:(g + 1) * H], H_pad) for g in range(3)], axis=-1)
    xw = xw.reshape(T, B, 3 * H_pad)
    xw = jnp.pad(xw, ((0, T_pad - T), (0, B_pad - B), (0, 0)))

    # ---- fused, padded recurrent weights (bf16 for the MXU) ------------------
    whh = jnp.zeros((H_pad, 3 * H_pad), f32)
    for g in range(3):
        whh = whh.at[:H, g * H_pad:g * H_pad + H].set(w_hh[g].astype(f32))
    whh = whh.astype(jnp.bfloat16)
    bhn = pad_last(b_hh[2].astype(f32), H_pad)                                   # (1, H_pad)

    # per-time-step active row count (lengths sorted descending -> prefix rows)
    nact = jnp.sum(
        batch_lengths.astype(jnp.int32)[None, :]
        > jnp.arange(T_pad, dtype=jnp.int32)[:, None],
        axis=1).astype(jnp.int32)                                                # (T_pad,)

    out_p, hfin_p = pl.pallas_call(
        gru_kernel,
        out_shape=(
            jax.ShapeDtypeStruct((T_pad, B_pad, H_pad), f32),
            jax.ShapeDtypeStruct((B_pad, H_pad), f32),
        ),
        grid_spec=pltpu.PrefetchScalarGridSpec(
            num_scalar_prefetch=1,
            grid=(nb, nt),
            in_specs=[
                pl.BlockSpec((t_blk, b_blk, 3 * H_pad),
                             lambda bb, tb, nact: (tb, bb, 0)),     # precomputed gates
                pl.BlockSpec((H_pad, 3 * H_pad),
                             lambda bb, tb, nact: (0, 0)),          # fused w_hh
                pl.BlockSpec((1, H_pad),
                             lambda bb, tb, nact: (0, 0)),          # n-gate bias
            ],
            out_specs=[
                pl.BlockSpec((t_blk, b_blk, H_pad),
                             lambda bb, tb, nact: (tb, bb, 0)),     # output block
                pl.BlockSpec((b_blk, H_pad),
                             lambda bb, tb, nact: (bb, 0)),         # final hidden
            ],
            scratch_shapes=[pltpu.VMEM((b_blk, H_pad), f32)],
        ),
        compiler_params=pltpu.CompilerParams(
            dimension_semantics=("parallel", "arbitrary"),
            vmem_limit_bytes=32 * 1024 * 1024,
        ),
    )(nact, xw, whh, bhn)

    out = out_p[:T, :B, :H]
    h_fin = hfin_p[:B, :H].reshape(1, B, H)
    return out, h_fin


def ref_augmented_gru(x, batch_lengths, w_ih, w_hh, b_ih, b_hh):
    """Pure-JAX f32 reference mirroring the PyTorch loop (eval mode, no dropout)."""
    T, B, _ = x.shape
    H = w_hh.shape[-1]
    h = jnp.zeros((B, H), jnp.float32)
    out = jnp.zeros((T, B, H), jnp.float32)
    for t in range(T):
        xt = x[t]
        i_r = xt @ w_ih[0] + b_ih[0]
        i_z = xt @ w_ih[1] + b_ih[1]
        i_n = xt @ w_ih[2] + b_ih[2]
        h_r = h @ w_hh[0] + b_hh[0]
        h_z = h @ w_hh[1] + b_hh[1]
        h_n = h @ w_hh[2] + b_hh[2]
        r = jax.nn.sigmoid(i_r + h_r)
        z = jax.nn.sigmoid(i_z + h_z)
        n = jnp.tanh(i_n + r * h_n)
        h_new = (1.0 - z) * n + z * h
        mask = batch_lengths.reshape(B, 1) > t
        h = jnp.where(mask, h_new, h)
        out = out.at[t].set(jnp.where(mask, h_new, 0.0))
    return out, h.reshape(1, B, H)


if __name__ == "__main__":
    # Small deterministic example: T=8 time steps, B=4, input_size=16, hidden=32.
    T, B, I, H = 8, 4, 16, 32
    key = jax.random.PRNGKey(0)
    kx, kwi, kwh, kbi, kbh = jax.random.split(key, 5)

    x = jax.random.normal(kx, (T, B, I), dtype=jnp.float32)
    # batch_lengths must be sorted descending (packed-sequence convention).
    batch_lengths = jnp.array([8, 6, 5, 3], dtype=jnp.int32)

    scale = 1.0 / jnp.sqrt(jnp.float32(H))
    w_ih = jax.random.uniform(kwi, (3, I, H), jnp.float32, -scale, scale)
    w_hh = jax.random.uniform(kwh, (3, H, H), jnp.float32, -scale, scale)
    b_ih = jax.random.uniform(kbi, (3, 1, H), jnp.float32, -scale, scale)
    b_hh = jax.random.uniform(kbh, (3, 1, H), jnp.float32, -scale, scale)

    fn = jax.jit(augmented_gru)
    out, h_fin = fn(x, batch_lengths, w_ih, w_hh, b_ih, b_hh)
    out = jax.block_until_ready(out)
    h_fin = jax.block_until_ready(h_fin)

    ref_out, ref_h = ref_augmented_gru(x, batch_lengths, w_ih, w_hh, b_ih, b_hh)
    assert out.shape == (T, B, H) and h_fin.shape == (1, B, H)
    # Recurrent matmul runs in bf16 on the MXU (f32 accumulate) -> loose tolerance.
    err_o = float(jnp.max(jnp.abs(out - ref_out)))
    err_h = float(jnp.max(jnp.abs(h_fin - ref_h)))
    assert err_o < 5e-2, f"output mismatch, max abs err {err_o}"
    assert err_h < 5e-2, f"hidden mismatch, max abs err {err_h}"

    print("KERNEL_OK")
</pallas_src>

<mosaic_0001>
module attributes {stable_mosaic.version = 11 : i64} {
  func.func @gru_kernel(%arg0: i32, %arg1: i32, %arg2: memref<8xi32, #tpu.memory_space<smem>>, %arg3: memref<8x8x384xf32, #tpu.memory_space<vmem>>, %arg4: memref<128x384xbf16, #tpu.memory_space<vmem>>, %arg5: memref<1x128xf32, #tpu.memory_space<vmem>>, %arg6: memref<8x8x128xf32, #tpu.memory_space<vmem>>, %arg7: memref<8x128xf32, #tpu.memory_space<vmem>>, %arg8: memref<8x128xf32, #tpu.memory_space<vmem>>) attributes {dimension_semantics = [#tpu.dimension_semantics<parallel>, #tpu.dimension_semantics<arbitrary>], iteration_bounds = array<i64: 1, 1>, scalar_prefetch = 1 : i64, scratch_operands = 1 : i64, tpu.core_type = #tpu.core_type<tc>, window_params = [{transform_indices = @transform_0, window_bounds = array<i64: 8, 8, 384>}, {pipeline_mode = #tpu.pipeline_mode<synchronous>, transform_indices = @transform_1, window_bounds = array<i64: 128, 384>}, {pipeline_mode = #tpu.pipeline_mode<synchronous>, transform_indices = @transform_2, window_bounds = array<i64: 1, 128>}, {transform_indices = @transform_3, window_bounds = array<i64: 8, 8, 128>}, {transform_indices = @transform_4, window_bounds = array<i64: 8, 128>}]} {
    %c0_i32 = arith.constant 0 : i32
    %0 = arith.cmpi eq, %arg1, %c0_i32 : i32
    %1 = arith.extui %0 : i1 to i32
    %c0_i32_0 = arith.constant 0 : i32
    %2 = arith.cmpi ne, %1, %c0_i32_0 : i32
    scf.if %2 {
      %cst = arith.constant 0.000000e+00 : f32
      %21 = vector.broadcast %cst : f32 to vector<8x128xf32>
      %c0_11 = arith.constant 0 : index
      %c0_12 = arith.constant 0 : index
      %22 = vector.load %arg8[%c0_11, %c0_12] : memref<8x128xf32, #tpu.memory_space<vmem>>, vector<8x128xf32>
      tpu.vector_store %arg8[%c0_11, %c0_12], %21 {strides = array<i32>} : memref<8x128xf32, #tpu.memory_space<vmem>>, vector<8x128xf32>,
    } else {
    }
    %c0 = arith.constant 0 : index
    %c0_1 = arith.constant 0 : index
    %3 = vector.load %arg4[%c0, %c0_1] : memref<128x384xbf16, #tpu.memory_space<vmem>>, vector<128x384xbf16>
    %c0_2 = arith.constant 0 : index
    %c0_3 = arith.constant 0 : index
    %4 = vector.load %arg5[%c0_2, %c0_3] : memref<1x128xf32, #tpu.memory_space<vmem>>, vector<1x128xf32>
    %5 = tpu.iota {dimensions = array<i32: 0>} : vector<8x1xi32>
    %c8_i32 = arith.constant 8 : i32
    %6 = arith.muli %arg0, %c8_i32 : i32
    %7 = vector.broadcast %6 : i32 to vector<8x1xi32>
    %8 = arith.addi %5, %7 : vector<8x1xi32>
    %c8_i32_4 = arith.constant 8 : i32
    %9 = arith.muli %arg1, %c8_i32_4 : i32
    %10 = arith.index_cast %9 : i32 to index
    %11 = memref.load %arg2[%10] : memref<8xi32, #tpu.memory_space<smem>>
    %c0_i32_5 = arith.constant 0 : i32
    %12 = arith.cmpi eq, %11, %c0_i32_5 : i32
    %13 = arith.extui %12 : i1 to i32
    %c0_i32_6 = arith.constant 0 : i32
    %14 = arith.cmpi ne, %13, %c0_i32_6 : i32
    scf.if %14 {
      %cst = arith.constant 0.000000e+00 : f32
      %21 = vector.broadcast %cst : f32 to vector<8x8x128xf32>
      %c0_11 = arith.constant 0 : index
      %c0_12 = arith.constant 0 : index
      %c0_13 = arith.constant 0 : index
      %22 = vector.load %arg6[%c0_11, %c0_12, %c0_13] : memref<8x8x128xf32, #tpu.memory_space<vmem>>, vector<8x8x128xf32>
      tpu.vector_store %arg6[%c0_11, %c0_12, %c0_13], %21 {strides = array<i32>} : memref<8x8x128xf32, #tpu.memory_space<vmem>>, vector<8x8x128xf32>,
    } else {
    }
    %c0_i32_7 = arith.constant 0 : i32
    %15 = arith.cmpi sgt, %11, %c0_i32_7 : i32
    %16 = arith.extui %15 : i1 to i32
    %c0_i32_8 = arith.constant 0 : i32
    %17 = arith.cmpi ne, %16, %c0_i32_8 : i32
    scf.if %17 {
      %c0_11 = arith.constant 0 : index
      %c0_12 = arith.constant 0 : index
      %21 = vector.load %arg8[%c0_11, %c0_12] : memref<8x128xf32, #tpu.memory_space<vmem>>, vector<8x128xf32>
      %c0_i32_13 = arith.constant 0 : i32
      %c8_i32_14 = arith.constant 8 : i32
      %22 = arith.muli %arg1, %c8_i32_14 : i32
      %23 = arith.addi %22, %c0_i32_13 : i32
      %24 = arith.index_cast %c0_i32_13 : i32 to index
      %c0_15 = arith.constant 0 : index
      %c0_16 = arith.constant 0 : index
      %25 = vector.load %arg3[%24, %c0_15, %c0_16] : memref<8x8x384xf32, #tpu.memory_space<vmem>>, vector<1x8x384xf32>
      %26 = vector.shape_cast %25 : vector<1x8x384xf32> to vector<8x384xf32>
      %27 = arith.truncf %21 : vector<8x128xf32> to vector<8x128xbf16>
      %cst = arith.constant dense<0.000000e+00> : vector<8x384xf32>
      %28 = tpu.matmul %27, %3, %cst {dimension_numbers = #tpu.dot_dimension_numbers<[1], [0], [0], [1], [0, 0, 1, 1], [], []>} : vector<8x128xbf16>, vector<128x384xbf16>, vector<8x384xf32> -> vector<8x384xf32>
      %29 = vector.extract_strided_slice %26 {offsets = [0, 0], sizes = [8, 128], strides = [1, 1]} : vector<8x384xf32> to vector<8x128xf32>
      %30 = vector.extract_strided_slice %28 {offsets = [0, 0], sizes = [8, 128], strides = [1, 1]} : vector<8x384xf32> to vector<8x128xf32>
      %31 = arith.addf %29, %30 : vector<8x128xf32>
      %32 = arith.negf %31 : vector<8x128xf32>
      %33 = math.exp %32 : vector<8x128xf32>
      %cst_17 = arith.constant 1.000000e+00 : f32
      %34 = vector.broadcast %cst_17 : f32 to vector<8x128xf32>
      %35 = arith.addf %34, %33 : vector<8x128xf32>
      %36 = arith.divf %34, %35 : vector<8x128xf32>
      %37 = vector.extract_strided_slice %26 {offsets = [0, 128], sizes = [8, 128], strides = [1, 1]} : vector<8x384xf32> to vector<8x128xf32>
      %38 = vector.extract_strided_slice %28 {offsets = [0, 128], sizes = [8, 128], strides = [1, 1]} : vector<8x384xf32> to vector<8x128xf32>
      %39 = arith.addf %37, %38 : vector<8x128xf32>
      %40 = arith.negf %39 : vector<8x128xf32>
      %41 = math.exp %40 : vector<8x128xf32>
      %cst_18 = arith.constant 1.000000e+00 : f32
      %42 = vector.broadcast %cst_18 : f32 to vector<8x128xf32>
      %43 = arith.addf %42, %41 : vector<8x128xf32>
      %44 = arith.divf %42, %43 : vector<8x128xf32>
      %45 = vector.extract_strided_slice %26 {offsets = [0, 256], sizes = [8, 128], strides = [1, 1]} : vector<8x384xf32> to vector<8x128xf32>
      %46 = vector.extract_strided_slice %28 {offsets = [0, 256], sizes = [8, 128], strides = [1, 1]} : vector<8x384xf32> to vector<8x128xf32>
      %47 = vector.broadcast %4 : vector<1x128xf32> to vector<8x128xf32>
      %48 = arith.addf %46, %47 : vector<8x128xf32>
      %49 = arith.mulf %36, %48 : vector<8x128xf32>
      %50 = arith.addf %45, %49 : vector<8x128xf32>
      %51 = math.tanh %50 : vector<8x128xf32>
      %cst_19 = arith.constant 1.000000e+00 : f32
      %52 = vector.broadcast %cst_19 : f32 to vector<8x128xf32>
      %53 = arith.subf %52, %44 : vector<8x128xf32>
      %54 = arith.mulf %53, %51 : vector<8x128xf32>
      %55 = arith.mulf %44, %21 : vector<8x128xf32>
      %56 = arith.addf %54, %55 : vector<8x128xf32>
      %57 = arith.index_cast %23 : i32 to index
      %58 = memref.load %arg2[%57] : memref<8xi32, #tpu.memory_space<smem>>
      %59 = vector.broadcast %58 : i32 to vector<8x1xi32>
      %60 = arith.cmpi slt, %8, %59 : vector<8x1xi32>
      %cst_20 = arith.constant 0.000000e+00 : f32
      %61 = vector.shape_cast %60 : vector<8x1xi1> to vector<8x1xi1>
      %62 = vector.broadcast %61 : vector<8x1xi1> to vector<8x128xi1>
      %63 = vector.broadcast %cst_20 : f32 to vector<8x128xf32>
      %64 = arith.select %62, %56, %63 : vector<8x128xi1>, vector<8x128xf32>
      %65 = arith.index_cast %c0_i32_13 : i32 to index
      %c0_21 = arith.constant 0 : index
      %c0_22 = arith.constant 0 : index
      %66 = vector.load %arg6[%65, %c0_21, %c0_22] : memref<8x8x128xf32, #tpu.memory_space<vmem>>, vector<1x8x128xf32>
      %67 = vector.shape_cast %66 : vector<1x8x128xf32> to vector<8x128xf32>
      %68 = vector.shape_cast %64 : vector<8x128xf32> to vector<1x8x128xf32>
      tpu.vector_store %arg6[%65, %c0_21, %c0_22], %68 {strides = array<i32>} : memref<8x8x128xf32, #tpu.memory_space<vmem>>, vector<1x8x128xf32>,
      %69 = vector.shape_cast %60 : vector<8x1xi1> to vector<8x1xi1>
      %70 = vector.broadcast %69 : vector<8x1xi1> to vector<8x128xi1>
      %71 = arith.select %70, %56, %21 : vector<8x128xi1>, vector<8x128xf32>
      %c1_i32 = arith.constant 1 : i32
      %c8_i32_23 = arith.constant 8 : i32
      %72 = arith.muli %arg1, %c8_i32_23 : i32
      %73 = arith.addi %72, %c1_i32 : i32
      %74 = arith.index_cast %c1_i32 : i32 to index
      %c0_24 = arith.constant 0 : index
      %c0_25 = arith.constant 0 : index
      %75 = vector.load %arg3[%74, %c0_24, %c0_25] : memref<8x8x384xf32, #tpu.memory_space<vmem>>, vector<1x8x384xf32>
      %76 = vector.shape_cast %75 : vector<1x8x384xf32> to vector<8x384xf32>
      %77 = arith.truncf %71 : vector<8x128xf32> to vector<8x128xbf16>
      %cst_26 = arith.constant dense<0.000000e+00> : vector<8x384xf32>
      %78 = tpu.matmul %77, %3, %cst_26 {dimension_numbers = #tpu.dot_dimension_numbers<[1], [0], [0], [1], [0, 0, 1, 1], [], []>} : vector<8x128xbf16>, vector<128x384xbf16>, vector<8x384xf32> -> vector<8x384xf32>
      %79 = vector.extract_strided_slice %76 {offsets = [0, 0], sizes = [8, 128], strides = [1, 1]} : vector<8x384xf32> to vector<8x128xf32>
      %80 = vector.extract_strided_slice %78 {offsets = [0, 0], sizes = [8, 128], strides = [1, 1]} : vector<8x384xf32> to vector<8x128xf32>
      %81 = arith.addf %79, %80 : vector<8x128xf32>
      %82 = arith.negf %81 : vector<8x128xf32>
      %83 = math.exp %82 : vector<8x128xf32>
      %cst_27 = arith.constant 1.000000e+00 : f32
      %84 = vector.broadcast %cst_27 : f32 to vector<8x128xf32>
      %85 = arith.addf %84, %83 : vector<8x128xf32>
      %86 = arith.divf %84, %85 : vector<8x128xf32>
      %87 = vector.extract_strided_slice %76 {offsets = [0, 128], sizes = [8, 128], strides = [1, 1]} : vector<8x384xf32> to vector<8x128xf32>
      %88 = vector.extract_strided_slice %78 {offsets = [0, 128], sizes = [8, 128], strides = [1, 1]} : vector<8x384xf32> to vector<8x128xf32>
      %89 = arith.addf %87, %88 : vector<8x128xf32>
      %90 = arith.negf %89 : vector<8x128xf32>
      %91 = math.exp %90 : vector<8x128xf32>
      %cst_28 = arith.constant 1.000000e+00 : f32
      %92 = vector.broadcast %cst_28 : f32 to vector<8x128xf32>
      %93 = arith.addf %92, %91 : vector<8x128xf32>
      %94 = arith.divf %92, %93 : vector<8x128xf32>
      %95 = vector.extract_strided_slice %76 {offsets = [0, 256], sizes = [8, 128], strides = [1, 1]} : vector<8x384xf32> to vector<8x128xf32>
      %96 = vector.extract_strided_slice %78 {offsets = [0, 256], sizes = [8, 128], strides = [1, 1]} : vector<8x384xf32> to vector<8x128xf32>
      %97 = vector.broadcast %4 : vector<1x128xf32> to vector<8x128xf32>
      %98 = arith.addf %96, %97 : vector<8x128xf32>
      %99 = arith.mulf %86, %98 : vector<8x128xf32>
      %100 = arith.addf %95, %99 : vector<8x128xf32>
      %101 = math.tanh %100 : vector<8x128xf32>
      %cst_29 = arith.constant 1.000000e+00 : f32
      %102 = vector.broadcast %cst_29 : f32 to vector<8x128xf32>
      %103 = arith.subf %102, %94 : vector<8x128xf32>
      %104 = arith.mulf %103, %101 : vector<8x128xf32>
      %105 = arith.mulf %94, %71 : vector<8x128xf32>
      %106 = arith.addf %104, %105 : vector<8x128xf32>
      %107 = arith.index_cast %73 : i32 to index
      %108 = memref.load %arg2[%107] : memref<8xi32, #tpu.memory_space<smem>>
      %109 = vector.broadcast %108 : i32 to vector<8x1xi32>
      %110 = arith.cmpi slt, %8, %109 : vector<8x1xi32>
      %cst_30 = arith.constant 0.000000e+00 : f32
      %111 = vector.shape_cast %110 : vector<8x1xi1> to vector<8x1xi1>
      %112 = vector.broadcast %111 : vector<8x1xi1> to vector<8x128xi1>
      %113 = vector.broadcast %cst_30 : f32 to vector<8x128xf32>
      %114 = arith.select %112, %106, %113 : vector<8x128xi1>, vector<8x128xf32>
      %115 = arith.index_cast %c1_i32 : i32 to index
      %c0_31 = arith.constant 0 : index
      %c0_32 = arith.constant 0 : index
      %116 = vector.load %arg6[%115, %c0_31, %c0_32] : memref<8x8x128xf32, #tpu.memory_space<vmem>>, vector<1x8x128xf32>
      %117 = vector.shape_cast %116 : vector<1x8x128xf32> to vector<8x128xf32>
      %118 = vector.shape_cast %114 : vector<8x128xf32> to vector<1x8x128xf32>
      tpu.vector_store %arg6[%115, %c0_31, %c0_32], %118 {strides = array<i32>} : memref<8x8x128xf32, #tpu.memory_space<vmem>>, vector<1x8x128xf32>,
      %119 = vector.shape_cast %110 : vector<8x1xi1> to vector<8x1xi1>
      %120 = vector.broadcast %119 : vector<8x1xi1> to vector<8x128xi1>
      %121 = arith.select %120, %106, %71 : vector<8x128xi1>, vector<8x128xf32>
      %c2_i32 = arith.constant 2 : i32
      %c8_i32_33 = arith.constant 8 : i32
      %122 = arith.muli %arg1, %c8_i32_33 : i32
      %123 = arith.addi %122, %c2_i32 : i32
      %124 = arith.index_cast %c2_i32 : i32 to index
      %c0_34 = arith.constant 0 : index
      %c0_35 = arith.constant 0 : index
      %125 = vector.load %arg3[%124, %c0_34, %c0_35] : memref<8x8x384xf32, #tpu.memory_space<vmem>>, vector<1x8x384xf32>
      %126 = vector.shape_cast %125 : vector<1x8x384xf32> to vector<8x384xf32>
      %127 = arith.truncf %121 : vector<8x128xf32> to vector<8x128xbf16>
      %cst_36 = arith.constant dense<0.000000e+00> : vector<8x384xf32>
      %128 = tpu.matmul %127, %3, %cst_36 {dimension_numbers = #tpu.dot_dimension_numbers<[1], [0], [0], [1], [0, 0, 1, 1], [], []>} : vector<8x128xbf16>, vector<128x384xbf16>, vector<8x384xf32> -> vector<8x384xf32>
      %129 = vector.extract_strided_slice %126 {offsets = [0, 0], sizes = [8, 128], strides = [1, 1]} : vector<8x384xf32> to vector<8x128xf32>
      %130 = vector.extract_strided_slice %128 {offsets = [0, 0], sizes = [8, 128], strides = [1, 1]} : vector<8x384xf32> to vector<8x128xf32>
      %131 = arith.addf %129, %130 : vector<8x128xf32>
      %132 = arith.negf %131 : vector<8x128xf32>
      %133 = math.exp %132 : vector<8x128xf32>
      %cst_37 = arith.constant 1.000000e+00 : f32
      %134 = vector.broadcast %cst_37 : f32 to vector<8x128xf32>
      %135 = arith.addf %134, %133 : vector<8x128xf32>
      %136 = arith.divf %134, %135 : vector<8x128xf32>
      %137 = vector.extract_strided_slice %126 {offsets = [0, 128], sizes = [8, 128], strides = [1, 1]} : vector<8x384xf32> to vector<8x128xf32>
      %138 = vector.extract_strided_slice %128 {offsets = [0, 128], sizes = [8, 128], strides = [1, 1]} : vector<8x384xf32> to vector<8x128xf32>
      %139 = arith.addf %137, %138 : vector<8x128xf32>
      %140 = arith.negf %139 : vector<8x128xf32>
      %141 = math.exp %140 : vector<8x128xf32>
      %cst_38 = arith.constant 1.000000e+00 : f32
      %142 = vector.broadcast %cst_38 : f32 to vector<8x128xf32>
      %143 = arith.addf %142, %141 : vector<8x128xf32>
      %144 = arith.divf %142, %143 : vector<8x128xf32>
      %145 = vector.extract_strided_slice %126 {offsets = [0, 256], sizes = [8, 128], strides = [1, 1]} : vector<8x384xf32> to vector<8x128xf32>
      %146 = vector.extract_strided_slice %128 {offsets = [0, 256], sizes = [8, 128], strides = [1, 1]} : vector<8x384xf32> to vector<8x128xf32>
      %147 = vector.broadcast %4 : vector<1x128xf32> to vector<8x128xf32>
      %148 = arith.addf %146, %147 : vector<8x128xf32>
      %149 = arith.mulf %136, %148 : vector<8x128xf32>
      %150 = arith.addf %145, %149 : vector<8x128xf32>
      %151 = math.tanh %150 : vector<8x128xf32>
      %cst_39 = arith.constant 1.000000e+00 : f32
      %152 = vector.broadcast %cst_39 : f32 to vector<8x128xf32>
      %153 = arith.subf %152, %144 : vector<8x128xf32>
      %154 = arith.mulf %153, %151 : vector<8x128xf32>
      %155 = arith.mulf %144, %121 : vector<8x128xf32>
      %156 = arith.addf %154, %155 : vector<8x128xf32>
      %157 = arith.index_cast %123 : i32 to index
      %158 = memref.load %arg2[%157] : memref<8xi32, #tpu.memory_space<smem>>
      %159 = vector.broadcast %158 : i32 to vector<8x1xi32>
      %160 = arith.cmpi slt, %8, %159 : vector<8x1xi32>
      %cst_40 = arith.constant 0.000000e+00 : f32
      %161 = vector.shape_cast %160 : vector<8x1xi1> to vector<8x1xi1>
      %162 = vector.broadcast %161 : vector<8x1xi1> to vector<8x128xi1>
      %163 = vector.broadcast %cst_40 : f32 to vector<8x128xf32>
      %164 = arith.select %162, %156, %163 : vector<8x128xi1>, vector<8x128xf32>
      %165 = arith.index_cast %c2_i32 : i32 to index
      %c0_41 = arith.constant 0 : index
      %c0_42 = arith.constant 0 : index
      %166 = vector.load %arg6[%165, %c0_41, %c0_42] : memref<8x8x128xf32, #tpu.memory_space<vmem>>, vector<1x8x128xf32>
      %167 = vector.shape_cast %166 : vector<1x8x128xf32> to vector<8x128xf32>
      %168 = vector.shape_cast %164 : vector<8x128xf32> to vector<1x8x128xf32>
      tpu.vector_store %arg6[%165, %c0_41, %c0_42], %168 {strides = array<i32>} : memref<8x8x128xf32, #tpu.memory_space<vmem>>, vector<1x8x128xf32>,
      %169 = vector.shape_cast %160 : vector<8x1xi1> to vector<8x1xi1>
      %170 = vector.broadcast %169 : vector<8x1xi1> to vector<8x128xi1>
      %171 = arith.select %170, %156, %121 : vector<8x128xi1>, vector<8x128xf32>
      %c3_i32 = arith.constant 3 : i32
      %c8_i32_43 = arith.constant 8 : i32
      %172 = arith.muli %arg1, %c8_i32_43 : i32
      %173 = arith.addi %172, %c3_i32 : i32
      %174 = arith.index_cast %c3_i32 : i32 to index
      %c0_44 = arith.constant 0 : index
      %c0_45 = arith.constant 0 : index
      %175 = vector.load %arg3[%174, %c0_44, %c0_45] : memref<8x8x384xf32, #tpu.memory_space<vmem>>, vector<1x8x384xf32>
      %176 = vector.shape_cast %175 : vector<1x8x384xf32> to vector<8x384xf32>
      %177 = arith.truncf %171 : vector<8x128xf32> to vector<8x128xbf16>
      %cst_46 = arith.constant dense<0.000000e+00> : vector<8x384xf32>
      %178 = tpu.matmul %177, %3, %cst_46 {dimension_numbers = #tpu.dot_dimension_numbers<[1], [0], [0], [1], [0, 0, 1, 1], [], []>} : vector<8x128xbf16>, vector<128x384xbf16>, vector<8x384xf32> -> vector<8x384xf32>
      %179 = vector.extract_strided_slice %176 {offsets = [0, 0], sizes = [8, 128], strides = [1, 1]} : vector<8x384xf32> to vector<8x128xf32>
      %180 = vector.extract_strided_slice %178 {offsets = [0, 0], sizes = [8, 128], strides = [1, 1]} : vector<8x384xf32> to vector<8x128xf32>
      %181 = arith.addf %179, %180 : vector<8x128xf32>
      %182 = arith.negf %181 : vector<8x128xf32>
      %183 = math.exp %182 : vector<8x128xf32>
      %cst_47 = arith.constant 1.000000e+00 : f32
      %184 = vector.broadcast %cst_47 : f32 to vector<8x128xf32>
      %185 = arith.addf %184, %183 : vector<8x128xf32>
      %186 = arith.divf %184, %185 : vector<8x128xf32>
      %187 = vector.extract_strided_slice %176 {offsets = [0, 128], sizes = [8, 128], strides = [1, 1]} : vector<8x384xf32> to vector<8x128xf32>
      %188 = vector.extract_strided_slice %178 {offsets = [0, 128], sizes = [8, 128], strides = [1, 1]} : vector<8x384xf32> to vector<8x128xf32>
      %189 = arith.addf %187, %188 : vector<8x128xf32>
      %190 = arith.negf %189 : vector<8x128xf32>
      %191 = math.exp %190 : vector<8x128xf32>
      %cst_48 = arith.constant 1.000000e+00 : f32
      %192 = vector.broadcast %cst_48 : f32 to vector<8x128xf32>
      %193 = arith.addf %192, %191 : vector<8x128xf32>
      %194 = arith.divf %192, %193 : vector<8x128xf32>
      %195 = vector.extract_strided_slice %176 {offsets = [0, 256], sizes = [8, 128], strides = [1, 1]} : vector<8x384xf32> to vector<8x128xf32>
      %196 = vector.extract_strided_slice %178 {offsets = [0, 256], sizes = [8, 128], strides = [1, 1]} : vector<8x384xf32> to vector<8x128xf32>
      %197 = vector.broadcast %4 : vector<1x128xf32> to vector<8x128xf32>
      %198 = arith.addf %196, %197 : vector<8x128xf32>
      %199 = arith.mulf %186, %198 : vector<8x128xf32>
      %200 = arith.addf %195, %199 : vector<8x128xf32>
      %201 = math.tanh %200 : vector<8x128xf32>
      %cst_49 = arith.constant 1.000000e+00 : f32
      %202 = vector.broadcast %cst_49 : f32 to vector<8x128xf32>
      %203 = arith.subf %202, %194 : vector<8x128xf32>
      %204 = arith.mulf %203, %201 : vector<8x128xf32>
      %205 = arith.mulf %194, %171 : vector<8x128xf32>
      %206 = arith.addf %204, %205 : vector<8x128xf32>
      %207 = arith.index_cast %173 : i32 to index
      %208 = memref.load %arg2[%207] : memref<8xi32, #tpu.memory_space<smem>>
      %209 = vector.broadcast %208 : i32 to vector<8x1xi32>
      %210 = arith.cmpi slt, %8, %209 : vector<8x1xi32>
      %cst_50 = arith.constant 0.000000e+00 : f32
      %211 = vector.shape_cast %210 : vector<8x1xi1> to vector<8x1xi1>
      %212 = vector.broadcast %211 : vector<8x1xi1> to vector<8x128xi1>
      %213 = vector.broadcast %cst_50 : f32 to vector<8x128xf32>
      %214 = arith.select %212, %206, %213 : vector<8x128xi1>, vector<8x128xf32>
      %215 = arith.index_cast %c3_i32 : i32 to index
      %c0_51 = arith.constant 0 : index
      %c0_52 = arith.constant 0 : index
      %216 = vector.load %arg6[%215, %c0_51, %c0_52] : memref<8x8x128xf32, #tpu.memory_space<vmem>>, vector<1x8x128xf32>
      %217 = vector.shape_cast %216 : vector<1x8x128xf32> to vector<8x128xf32>
      %218 = vector.shape_cast %214 : vector<8x128xf32> to vector<1x8x128xf32>
      tpu.vector_store %arg6[%215, %c0_51, %c0_52], %218 {strides = array<i32>} : memref<8x8x128xf32, #tpu.memory_space<vmem>>, vector<1x8x128xf32>,
      %219 = vector.shape_cast %210 : vector<8x1xi1> to vector<8x1xi1>
      %220 = vector.broadcast %219 : vector<8x1xi1> to vector<8x128xi1>
      %221 = arith.select %220, %206, %171 : vector<8x128xi1>, vector<8x128xf32>
      %c4_i32 = arith.constant 4 : i32
      %c8_i32_53 = arith.constant 8 : i32
      %222 = arith.muli %arg1, %c8_i32_53 : i32
      %223 = arith.addi %222, %c4_i32 : i32
      %224 = arith.index_cast %c4_i32 : i32 to index
      %c0_54 = arith.constant 0 : index
      %c0_55 = arith.constant 0 : index
      %225 = vector.load %arg3[%224, %c0_54, %c0_55] : memref<8x8x384xf32, #tpu.memory_space<vmem>>, vector<1x8x384xf32>
      %226 = vector.shape_cast %225 : vector<1x8x384xf32> to vector<8x384xf32>
      %227 = arith.truncf %221 : vector<8x128xf32> to vector<8x128xbf16>
      %cst_56 = arith.constant dense<0.000000e+00> : vector<8x384xf32>
      %228 = tpu.matmul %227, %3, %cst_56 {dimension_numbers = #tpu.dot_dimension_numbers<[1], [0], [0], [1], [0, 0, 1, 1], [], []>} : vector<8x128xbf16>, vector<128x384xbf16>, vector<8x384xf32> -> vector<8x384xf32>
      %229 = vector.extract_strided_slice %226 {offsets = [0, 0], sizes = [8, 128], strides = [1, 1]} : vector<8x384xf32> to vector<8x128xf32>
      %230 = vector.extract_strided_slice %228 {offsets = [0, 0], sizes = [8, 128], strides = [1, 1]} : vector<8x384xf32> to vector<8x128xf32>
      %231 = arith.addf %229, %230 : vector<8x128xf32>
      %232 = arith.negf %231 : vector<8x128xf32>
      %233 = math.exp %232 : vector<8x128xf32>
      %cst_57 = arith.constant 1.000000e+00 : f32
      %234 = vector.broadcast %cst_57 : f32 to vector<8x128xf32>
      %235 = arith.addf %234, %233 : vector<8x128xf32>
      %236 = arith.divf %234, %235 : vector<8x128xf32>
      %237 = vector.extract_strided_slice %226 {offsets = [0, 128], sizes = [8, 128], strides = [1, 1]} : vector<8x384xf32> to vector<8x128xf32>
      %238 = vector.extract_strided_slice %228 {offsets = [0, 128], sizes = [8, 128], strides = [1, 1]} : vector<8x384xf32> to vector<8x128xf32>
      %239 = arith.addf %237, %238 : vector<8x128xf32>
      %240 = arith.negf %239 : vector<8x128xf32>
      %241 = math.exp %240 : vector<8x128xf32>
      %cst_58 = arith.constant 1.000000e+00 : f32
      %242 = vector.broadcast %cst_58 : f32 to vector<8x128xf32>
      %243 = arith.addf %242, %241 : vector<8x128xf32>
      %244 = arith.divf %242, %243 : vector<8x128xf32>
      %245 = vector.extract_strided_slice %226 {offsets = [0, 256], sizes = [8, 128], strides = [1, 1]} : vector<8x384xf32> to vector<8x128xf32>
      %246 = vector.extract_strided_slice %228 {offsets = [0, 256], sizes = [8, 128], strides = [1, 1]} : vector<8x384xf32> to vector<8x128xf32>
      %247 = vector.broadcast %4 : vector<1x128xf32> to vector<8x128xf32>
      %248 = arith.addf %246, %247 : vector<8x128xf32>
      %249 = arith.mulf %236, %248 : vector<8x128xf32>
      %250 = arith.addf %245, %249 : vector<8x128xf32>
      %251 = math.tanh %250 : vector<8x128xf32>
      %cst_59 = arith.constant 1.000000e+00 : f32
      %252 = vector.broadcast %cst_59 : f32 to vector<8x128xf32>
      %253 = arith.subf %252, %244 : vector<8x128xf32>
      %254 = arith.mulf %253, %251 : vector<8x128xf32>
      %255 = arith.mulf %244, %221 : vector<8x128xf32>
      %256 = arith.addf %254, %255 : vector<8x128xf32>
      %257 = arith.index_cast %223 : i32 to index
      %258 = memref.load %arg2[%257] : memref<8xi32, #tpu.memory_space<smem>>
      %259 = vector.broadcast %258 : i32 to vector<8x1xi32>
      %260 = arith.cmpi slt, %8, %259 : vector<8x1xi32>
      %cst_60 = arith.constant 0.000000e+00 : f32
      %261 = vector.shape_cast %260 : vector<8x1xi1> to vector<8x1xi1>
      %262 = vector.broadcast %261 : vector<8x1xi1> to vector<8x128xi1>
      %263 = vector.broadcast %cst_60 : f32 to vector<8x128xf32>
      %264 = arith.select %262, %256, %263 : vector<8x128xi1>, vector<8x128xf32>
      %265 = arith.index_cast %c4_i32 : i32 to index
      %c0_61 = arith.constant 0 : index
      %c0_62 = arith.constant 0 : index
      %266 = vector.load %arg6[%265, %c0_61, %c0_62] : memref<8x8x128xf32, #tpu.memory_space<vmem>>, vector<1x8x128xf32>
      %267 = vector.shape_cast %266 : vector<1x8x128xf32> to vector<8x128xf32>
      %268 = vector.shape_cast %264 : vector<8x128xf32> to vector<1x8x128xf32>
      tpu.vector_store %arg6[%265, %c0_61, %c0_62], %268 {strides = array<i32>} : memref<8x8x128xf32, #tpu.memory_space<vmem>>, vector<1x8x128xf32>,
      %269 = vector.shape_cast %260 : vector<8x1xi1> to vector<8x1xi1>
      %270 = vector.broadcast %269 : vector<8x1xi1> to vector<8x128xi1>
      %271 = arith.select %270, %256, %221 : vector<8x128xi1>, vector<8x128xf32>
      %c5_i32 = arith.constant 5 : i32
      %c8_i32_63 = arith.constant 8 : i32
      %272 = arith.muli %arg1, %c8_i32_63 : i32
      %273 = arith.addi %272, %c5_i32 : i32
      %274 = arith.index_cast %c5_i32 : i32 to index
      %c0_64 = arith.constant 0 : index
      %c0_65 = arith.constant 0 : index
      %275 = vector.load %arg3[%274, %c0_64, %c0_65] : memref<8x8x384xf32, #tpu.memory_space<vmem>>, vector<1x8x384xf32>
      %276 = vector.shape_cast %275 : vector<1x8x384xf32> to vector<8x384xf32>
      %277 = arith.truncf %271 : vector<8x128xf32> to vector<8x128xbf16>
      %cst_66 = arith.constant dense<0.000000e+00> : vector<8x384xf32>
      %278 = tpu.matmul %277, %3, %cst_66 {dimension_numbers = #tpu.dot_dimension_numbers<[1], [0], [0], [1], [0, 0, 1, 1], [], []>} : vector<8x128xbf16>, vector<128x384xbf16>, vector<8x384xf32> -> vector<8x384xf32>
      %279 = vector.extract_strided_slice %276 {offsets = [0, 0], sizes = [8, 128], strides = [1, 1]} : vector<8x384xf32> to vector<8x128xf32>
      %280 = vector.extract_strided_slice %278 {offsets = [0, 0], sizes = [8, 128], strides = [1, 1]} : vector<8x384xf32> to vector<8x128xf32>
      %281 = arith.addf %279, %280 : vector<8x128xf32>
      %282 = arith.negf %281 : vector<8x128xf32>
      %283 = math.exp %282 : vector<8x128xf32>
      %cst_67 = arith.constant 1.000000e+00 : f32
      %284 = vector.broadcast %cst_67 : f32 to vector<8x128xf32>
      %285 = arith.addf %284, %283 : vector<8x128xf32>
      %286 = arith.divf %284, %285 : vector<8x128xf32>
      %287 = vector.extract_strided_slice %276 {offsets = [0, 128], sizes = [8, 128], strides = [1, 1]} : vector<8x384xf32> to vector<8x128xf32>
      %288 = vector.extract_strided_slice %278 {offsets = [0, 128], sizes = [8, 128], strides = [1, 1]} : vector<8x384xf32> to vector<8x128xf32>
      %289 = arith.addf %287, %288 : vector<8x128xf32>
      %290 = arith.negf %289 : vector<8x128xf32>
      %291 = math.exp %290 : vector<8x128xf32>
      %cst_68 = arith.constant 1.000000e+00 : f32
      %292 = vector.broadcast %cst_68 : f32 to vector<8x128xf32>
      %293 = arith.addf %292, %291 : vector<8x128xf32>
      %294 = arith.divf %292, %293 : vector<8x128xf32>
      %295 = vector.extract_strided_slice %276 {offsets = [0, 256], sizes = [8, 128], strides = [1, 1]} : vector<8x384xf32> to vector<8x128xf32>
      %296 = vector.extract_strided_slice %278 {offsets = [0, 256], sizes = [8, 128], strides = [1, 1]} : vector<8x384xf32> to vector<8x128xf32>
      %297 = vector.broadcast %4 : vector<1x128xf32> to vector<8x128xf32>
      %298 = arith.addf %296, %297 : vector<8x128xf32>
      %299 = arith.mulf %286, %298 : vector<8x128xf32>
      %300 = arith.addf %295, %299 : vector<8x128xf32>
      %301 = math.tanh %300 : vector<8x128xf32>
      %cst_69 = arith.constant 1.000000e+00 : f32
      %302 = vector.broadcast %cst_69 : f32 to vector<8x128xf32>
      %303 = arith.subf %302, %294 : vector<8x128xf32>
      %304 = arith.mulf %303, %301 : vector<8x128xf32>
      %305 = arith.mulf %294, %271 : vector<8x128xf32>
      %306 = arith.addf %304, %305 : vector<8x128xf32>
      %307 = arith.index_cast %273 : i32 to index
      %308 = memref.load %arg2[%307] : memref<8xi32, #tpu.memory_space<smem>>
      %309 = vector.broadcast %308 : i32 to vector<8x1xi32>
      %310 = arith.cmpi slt, %8, %309 : vector<8x1xi32>
      %cst_70 = arith.constant 0.000000e+00 : f32
      %311 = vector.shape_cast %310 : vector<8x1xi1> to vector<8x1xi1>
      %312 = vector.broadcast %311 : vector<8x1xi1> to vector<8x128xi1>
      %313 = vector.broadcast %cst_70 : f32 to vector<8x128xf32>
      %314 = arith.select %312, %306, %313 : vector<8x128xi1>, vector<8x128xf32>
      %315 = arith.index_cast %c5_i32 : i32 to index
      %c0_71 = arith.constant 0 : index
      %c0_72 = arith.constant 0 : index
      %316 = vector.load %arg6[%315, %c0_71, %c0_72] : memref<8x8x128xf32, #tpu.memory_space<vmem>>, vector<1x8x128xf32>
      %317 = vector.shape_cast %316 : vector<1x8x128xf32> to vector<8x128xf32>
      %318 = vector.shape_cast %314 : vector<8x128xf32> to vector<1x8x128xf32>
      tpu.vector_store %arg6[%315, %c0_71, %c0_72], %318 {strides = array<i32>} : memref<8x8x128xf32, #tpu.memory_space<vmem>>, vector<1x8x128xf32>,
      %319 = vector.shape_cast %310 : vector<8x1xi1> to vector<8x1xi1>
      %320 = vector.broadcast %319 : vector<8x1xi1> to vector<8x128xi1>
      %321 = arith.select %320, %306, %271 : vector<8x128xi1>, vector<8x128xf32>
      %c6_i32 = arith.constant 6 : i32
      %c8_i32_73 = arith.constant 8 : i32
      %322 = arith.muli %arg1, %c8_i32_73 : i32
      %323 = arith.addi %322, %c6_i32 : i32
      %324 = arith.index_cast %c6_i32 : i32 to index
      %c0_74 = arith.constant 0 : index
      %c0_75 = arith.constant 0 : index
      %325 = vector.load %arg3[%324, %c0_74, %c0_75] : memref<8x8x384xf32, #tpu.memory_space<vmem>>, vector<1x8x384xf32>
      %326 = vector.shape_cast %325 : vector<1x8x384xf32> to vector<8x384xf32>
      %327 = arith.truncf %321 : vector<8x128xf32> to vector<8x128xbf16>
      %cst_76 = arith.constant dense<0.000000e+00> : vector<8x384xf32>
      %328 = tpu.matmul %327, %3, %cst_76 {dimension_numbers = #tpu.dot_dimension_numbers<[1], [0], [0], [1], [0, 0, 1, 1], [], []>} : vector<8x128xbf16>, vector<128x384xbf16>, vector<8x384xf32> -> vector<8x384xf32>
      %329 = vector.extract_strided_slice %326 {offsets = [0, 0], sizes = [8, 128], strides = [1, 1]} : vector<8x384xf32> to vector<8x128xf32>
      %330 = vector.extract_strided_slice %328 {offsets = [0, 0], sizes = [8, 128], strides = [1, 1]} : vector<8x384xf32> to vector<8x128xf32>
      %331 = arith.addf %329, %330 : vector<8x128xf32>
      %332 = arith.negf %331 : vector<8x128xf32>
      %333 = math.exp %332 : vector<8x128xf32>
      %cst_77 = arith.constant 1.000000e+00 : f32
      %334 = vector.broadcast %cst_77 : f32 to vector<8x128xf32>
      %335 = arith.addf %334, %333 : vector<8x128xf32>
      %336 = arith.divf %334, %335 : vector<8x128xf32>
      %337 = vector.extract_strided_slice %326 {offsets = [0, 128], sizes = [8, 128], strides = [1, 1]} : vector<8x384xf32> to vector<8x128xf32>
      %338 = vector.extract_strided_slice %328 {offsets = [0, 128], sizes = [8, 128], strides = [1, 1]} : vector<8x384xf32> to vector<8x128xf32>
      %339 = arith.addf %337, %338 : vector<8x128xf32>
      %340 = arith.negf %339 : vector<8x128xf32>
      %341 = math.exp %340 : vector<8x128xf32>
      %cst_78 = arith.constant 1.000000e+00 : f32
      %342 = vector.broadcast %cst_78 : f32 to vector<8x128xf32>
      %343 = arith.addf %342, %341 : vector<8x128xf32>
      %344 = arith.divf %342, %343 : vector<8x128xf32>
      %345 = vector.extract_strided_slice %326 {offsets = [0, 256], sizes = [8, 128], strides = [1, 1]} : vector<8x384xf32> to vector<8x128xf32>
      %346 = vector.extract_strided_slice %328 {offsets = [0, 256], sizes = [8, 128], strides = [1, 1]} : vector<8x384xf32> to vector<8x128xf32>
      %347 = vector.broadcast %4 : vector<1x128xf32> to vector<8x128xf32>
      %348 = arith.addf %346, %347 : vector<8x128xf32>
      %349 = arith.mulf %336, %348 : vector<8x128xf32>
      %350 = arith.addf %345, %349 : vector<8x128xf32>
      %351 = math.tanh %350 : vector<8x128xf32>
      %cst_79 = arith.constant 1.000000e+00 : f32
      %352 = vector.broadcast %cst_79 : f32 to vector<8x128xf32>
      %353 = arith.subf %352, %344 : vector<8x128xf32>
      %354 = arith.mulf %353, %351 : vector<8x128xf32>
      %355 = arith.mulf %344, %321 : vector<8x128xf32>
      %356 = arith.addf %354, %355 : vector<8x128xf32>
      %357 = arith.index_cast %323 : i32 to index
      %358 = memref.load %arg2[%357] : memref<8xi32, #tpu.memory_space<smem>>
      %359 = vector.broadcast %358 : i32 to vector<8x1xi32>
      %360 = arith.cmpi slt, %8, %359 : vector<8x1xi32>
      %cst_80 = arith.constant 0.000000e+00 : f32
      %361 = vector.shape_cast %360 : vector<8x1xi1> to vector<8x1xi1>
      %362 = vector.broadcast %361 : vector<8x1xi1> to vector<8x128xi1>
      %363 = vector.broadcast %cst_80 : f32 to vector<8x128xf32>
      %364 = arith.select %362, %356, %363 : vector<8x128xi1>, vector<8x128xf32>
      %365 = arith.index_cast %c6_i32 : i32 to index
      %c0_81 = arith.constant 0 : index
      %c0_82 = arith.constant 0 : index
      %366 = vector.load %arg6[%365, %c0_81, %c0_82] : memref<8x8x128xf32, #tpu.memory_space<vmem>>, vector<1x8x128xf32>
      %367 = vector.shape_cast %366 : vector<1x8x128xf32> to vector<8x128xf32>
      %368 = vector.shape_cast %364 : vector<8x128xf32> to vector<1x8x128xf32>
      tpu.vector_store %arg6[%365, %c0_81, %c0_82], %368 {strides = array<i32>} : memref<8x8x128xf32, #tpu.memory_space<vmem>>, vector<1x8x128xf32>,
      %369 = vector.shape_cast %360 : vector<8x1xi1> to vector<8x1xi1>
      %370 = vector.broadcast %369 : vector<8x1xi1> to vector<8x128xi1>
      %371 = arith.select %370, %356, %321 : vector<8x128xi1>, vector<8x128xf32>
      %c7_i32 = arith.constant 7 : i32
      %c8_i32_83 = arith.constant 8 : i32
      %372 = arith.muli %arg1, %c8_i32_83 : i32
      %373 = arith.addi %372, %c7_i32 : i32
      %374 = arith.index_cast %c7_i32 : i32 to index
      %c0_84 = arith.constant 0 : index
      %c0_85 = arith.constant 0 : index
      %375 = vector.load %arg3[%374, %c0_84, %c0_85] : memref<8x8x384xf32, #tpu.memory_space<vmem>>, vector<1x8x384xf32>
      %376 = vector.shape_cast %375 : vector<1x8x384xf32> to vector<8x384xf32>
      %377 = arith.truncf %371 : vector<8x128xf32> to vector<8x128xbf16>
      %cst_86 = arith.constant dense<0.000000e+00> : vector<8x384xf32>
      %378 = tpu.matmul %377, %3, %cst_86 {dimension_numbers = #tpu.dot_dimension_numbers<[1], [0], [0], [1], [0, 0, 1, 1], [], []>} : vector<8x128xbf16>, vector<128x384xbf16>, vector<8x384xf32> -> vector<8x384xf32>
      %379 = vector.extract_strided_slice %376 {offsets = [0, 0], sizes = [8, 128], strides = [1, 1]} : vector<8x384xf32> to vector<8x128xf32>
      %380 = vector.extract_strided_slice %378 {offsets = [0, 0], sizes = [8, 128], strides = [1, 1]} : vector<8x384xf32> to vector<8x128xf32>
      %381 = arith.addf %379, %380 : vector<8x128xf32>
      %382 = arith.negf %381 : vector<8x128xf32>
      %383 = math.exp %382 : vector<8x128xf32>
      %cst_87 = arith.constant 1.000000e+00 : f32
      %384 = vector.broadcast %cst_87 : f32 to vector<8x128xf32>
      %385 = arith.addf %384, %383 : vector<8x128xf32>
      %386 = arith.divf %384, %385 : vector<8x128xf32>
      %387 = vector.extract_strided_slice %376 {offsets = [0, 128], sizes = [8, 128], strides = [1, 1]} : vector<8x384xf32> to vector<8x128xf32>
      %388 = vector.extract_strided_slice %378 {offsets = [0, 128], sizes = [8, 128], strides = [1, 1]} : vector<8x384xf32> to vector<8x128xf32>
      %389 = arith.addf %387, %388 : vector<8x128xf32>
      %390 = arith.negf %389 : vector<8x128xf32>
      %391 = math.exp %390 : vector<8x128xf32>
      %cst_88 = arith.constant 1.000000e+00 : f32
      %392 = vector.broadcast %cst_88 : f32 to vector<8x128xf32>
      %393 = arith.addf %392, %391 : vector<8x128xf32>
      %394 = arith.divf %392, %393 : vector<8x128xf32>
      %395 = vector.extract_strided_slice %376 {offsets = [0, 256], sizes = [8, 128], strides = [1, 1]} : vector<8x384xf32> to vector<8x128xf32>
      %396 = vector.extract_strided_slice %378 {offsets = [0, 256], sizes = [8, 128], strides = [1, 1]} : vector<8x384xf32> to vector<8x128xf32>
      %397 = vector.broadcast %4 : vector<1x128xf32> to vector<8x128xf32>
      %398 = arith.addf %396, %397 : vector<8x128xf32>
      %399 = arith.mulf %386, %398 : vector<8x128xf32>
      %400 = arith.addf %395, %399 : vector<8x128xf32>
      %401 = math.tanh %400 : vector<8x128xf32>
      %cst_89 = arith.constant 1.000000e+00 : f32
      %402 = vector.broadcast %cst_89 : f32 to vector<8x128xf32>
      %403 = arith.subf %402, %394 : vector<8x128xf32>
      %404 = arith.mulf %403, %401 : vector<8x128xf32>
      %405 = arith.mulf %394, %371 : vector<8x128xf32>
      %406 = arith.addf %404, %405 : vector<8x128xf32>
      %407 = arith.index_cast %373 : i32 to index
      %408 = memref.load %arg2[%407] : memref<8xi32, #tpu.memory_space<smem>>
      %409 = vector.broadcast %408 : i32 to vector<8x1xi32>
      %410 = arith.cmpi slt, %8, %409 : vector<8x1xi32>
      %cst_90 = arith.constant 0.000000e+00 : f32
      %411 = vector.shape_cast %410 : vector<8x1xi1> to vector<8x1xi1>
      %412 = vector.broadcast %411 : vector<8x1xi1> to vector<8x128xi1>
      %413 = vector.broadcast %cst_90 : f32 to vector<8x128xf32>
      %414 = arith.select %412, %406, %413 : vector<8x128xi1>, vector<8x128xf32>
      %415 = arith.index_cast %c7_i32 : i32 to index
      %c0_91 = arith.constant 0 : index
      %c0_92 = arith.constant 0 : index
      %416 = vector.load %arg6[%415, %c0_91, %c0_92] : memref<8x8x128xf32, #tpu.memory_space<vmem>>, vector<1x8x128xf32>
      %417 = vector.shape_cast %416 : vector<1x8x128xf32> to vector<8x128xf32>
      %418 = vector.shape_cast %414 : vector<8x128xf32> to vector<1x8x128xf32>
      tpu.vector_store %arg6[%415, %c0_91, %c0_92], %418 {strides = array<i32>} : memref<8x8x128xf32, #tpu.memory_space<vmem>>, vector<1x8x128xf32>,
      %419 = vector.shape_cast %410 : vector<8x1xi1> to vector<8x1xi1>
      %420 = vector.broadcast %419 : vector<8x1xi1> to vector<8x128xi1>
      %421 = arith.select %420, %406, %371 : vector<8x128xi1>, vector<8x128xf32>
      %c8_i32_93 = arith.constant 8 : i32
      %c0_94 = arith.constant 0 : index
      %c0_95 = arith.constant 0 : index
      %422 = vector.load %arg8[%c0_94, %c0_95] : memref<8x128xf32, #tpu.memory_space<vmem>>, vector<8x128xf32>
      tpu.vector_store %arg8[%c0_94, %c0_95], %421 {strides = array<i32>} : memref<8x128xf32, #tpu.memory_space<vmem>>, vector<8x128xf32>,
    } else {
    }
    %c0_i32_9 = arith.constant 0 : i32
    %18 = arith.cmpi eq, %arg1, %c0_i32_9 : i32
    %19 = arith.extui %18 : i1 to i32
    %c0_i32_10 = arith.constant 0 : i32
    %20 = arith.cmpi ne, %19, %c0_i32_10 : i32
    scf.if %20 {
      %c0_11 = arith.constant 0 : index
      %c0_12 = arith.constant 0 : index
      %21 = vector.load %arg8[%c0_11, %c0_12] : memref<8x128xf32, #tpu.memory_space<vmem>>, vector<8x128xf32>
      %c0_13 = arith.constant 0 : index
      %c0_14 = arith.constant 0 : index
      %22 = vector.load %arg7[%c0_13, %c0_14] : memref<8x128xf32, #tpu.memory_space<vmem>>, vector<8x128xf32>
      tpu.vector_store %arg7[%c0_13, %c0_14], %21 {strides = array<i32>} : memref<8x128xf32, #tpu.memory_space<vmem>>, vector<8x128xf32>,
    } else {
    }
    return
  }
  func.func @transform_0(%arg0: i32, %arg1: i32, %arg2: memref<8xi32, #tpu.memory_space<smem>>) -> (i32, i32, i32) {
    %c0_i32 = arith.constant 0 : i32
    %c0_i32_0 = arith.constant 0 : i32
    return %arg1, %arg0, %c0_i32 : i32, i32, i32
  }
  func.func @transform_1(%arg0: i32, %arg1: i32, %arg2: memref<8xi32, #tpu.memory_space<smem>>) -> (i32, i32) {
    %c0_i32 = arith.constant 0 : i32
    %c0_i32_0 = arith.constant 0 : i32
    %c0_i32_1 = arith.constant 0 : i32
    return %c0_i32, %c0_i32_0 : i32, i32
  }
  func.func @transform_2(%arg0: i32, %arg1: i32, %arg2: memref<8xi32, #tpu.memory_space<smem>>) -> (i32, i32) {
    %c0_i32 = arith.constant 0 : i32
    %c0_i32_0 = arith.constant 0 : i32
    %c0_i32_1 = arith.constant 0 : i32
    return %c0_i32, %c0_i32_0 : i32, i32
  }
  func.func @transform_3(%arg0: i32, %arg1: i32, %arg2: memref<8xi32, #tpu.memory_space<smem>>) -> (i32, i32, i32) {
    %c0_i32 = arith.constant 0 : i32
    %c0_i32_0 = arith.constant 0 : i32
    return %arg1, %arg0, %c0_i32 : i32, i32, i32
  }
  func.func @transform_4(%arg0: i32, %arg1: i32, %arg2: memref<8xi32, #tpu.memory_space<smem>>) -> (i32, i32) {
    %c0_i32 = arith.constant 0 : i32
    %c0_i32_0 = arith.constant 0 : i32
    return %arg0, %c0_i32 : i32, i32
  }
}

</mosaic_0001>

<llo_original>
// kernel: augmented_gru.1
$region0: #{augmented_gru.1}
  #allocation0 [shape = 'u32[]', space=smem, size = 0x4, offset = 0x4, fixed_abs, tag = 'smem constant byte address 0x4 - core index']
  #allocation1 [shape = 'u32[72,128]{1,0:T(1,128)}', space=vmem, size = 0x9000, scoped, tag = 'internal scratch']
  #allocation2 [shape = 'f32[8,128]{1,0:T(8,128)}', space=vmem, size = 0x1000, scoped, tag = 'scratch operand']
  #allocation3 [shape = 's32[1]{0}', space=sflag, size = 0x4, scoped, tag = 'scoped memory for augmented_gru.1']
  #allocation4 [shape = 'u8[512]{0}', space=smem, size = 0x200, scoped, tag = 'prefetched SMEM operand 0']
  %s0 = inlined_call_operand.vmem [shape: s32[8], index: 0, kind: input, shape index: {}]
  %s1 = inlined_call_operand.vmem [shape: f32[8,8,384], index: 1, kind: input, shape index: {}]
  %s2 = inlined_call_operand.vmem [shape: bf16[128,384], index: 2, kind: input, shape index: {}]
  %s3 = inlined_call_operand.vmem [shape: f32[1,128], index: 3, kind: input, shape index: {}]
  %s4 = inlined_call_operand.vmem [shape: f32[8,8,128], index: 4, kind: output, shape index: {0}]
  %s5 = inlined_call_operand.vmem [shape: f32[8,128], index: 5, kind: output, shape index: {1}]
  %6 = xla_tuple %s4, %s5
  %s7 = sld [smem:[#allocation0]]
  $region46: #{augmented_gru.1} parent=0
    _
  %s9 = ssub.s32 1, %s7
  %s10 = scalar_select 0, %s9, %s7
  %s12 = sshll.u32 %s0, 4
  %s13 = int_to_ptr.vmem [resolvable:$true] %s12
  %15 = dma.vmem_to_smem %s13, 16, [#allocation4], [#allocation3]
  %17 = dma.done [#allocation3], 16
  %18 = sfence
  // Predicated region
  $region2: #{augmented_gru.1} parent=0 // pred_check
    _
  $region3: #{augmented_gru.1} parent=0 // pred_check_branch
    %20 = sbr.rel (0) target = $region5
  $region4: #{augmented_gru.1} parent=0 // pred_region
    _
  $region5: #{augmented_gru.1} parent=0 // pred_fallthru
    _
  // Predicated region
  $region6: #{augmented_gru.1} parent=0 // pred_check
    _
  $region7: #{augmented_gru.1} parent=0 // pred_check_branch
    %22 = sbr.rel (0) target = $region9
  $region8: #{augmented_gru.1} parent=0 // pred_region
    _
  $region9: #{augmented_gru.1} parent=0 // pred_fallthru
    _
  // Predicated region
  $region10: #{augmented_gru.1} parent=0 // pred_check
    _
  $region11: #{augmented_gru.1} parent=0 // pred_check_branch
    %24 = sbr.rel (0) target = $region13
  $region12: #{augmented_gru.1} parent=0 // pred_region
    _
  $region13: #{augmented_gru.1} parent=0 // pred_fallthru
    _
  %p25 = scmp.eq.s32.totalorder 0, 0
  // Predicated region
  $region14: #{augmented_gru.1} parent=0 // pred_check
    %p26 = pneg %p25
  $region15: #{augmented_gru.1} parent=0 // pred_check_branch
    %28 = sbr.rel (%p26) target = $region17
  $region16: #{augmented_gru.1} parent=0 // pred_region
    %29 = vst [vmem:[#allocation2] sm:$0xff] 0.0
  $region17: #{augmented_gru.1} parent=0 // pred_fallthru
    _
  %v30 = vld [vmem:[%s2] sm:$0xff]
  %v31 = vld [vmem:[%s2 + $0x8] sm:$0xf]
  %v32 = vld [vmem:[%s2 + $0xc] sm:$0xff]
  %v33 = vld [vmem:[%s2 + $0x14] sm:$0xf]
  %v34 = vld [vmem:[%s2 + $0x18] sm:$0xff]
  %v35 = vld [vmem:[%s2 + $0x20] sm:$0xf]
  %v36 = vld [vmem:[%s2 + $0x24] sm:$0xff]
  %v37 = vld [vmem:[%s2 + $0x2c] sm:$0xf]
  %v38 = vld [vmem:[%s2 + $0x30] sm:$0xff]
  %v39 = vld [vmem:[%s2 + $0x38] sm:$0xf]
  %v40 = vld [vmem:[%s2 + $0x3c] sm:$0xff]
  %v41 = vld [vmem:[%s2 + $0x44] sm:$0xf]
  %v42 = vld [vmem:[%s2 + $0x48] sm:$0xff]
  %v43 = vld [vmem:[%s2 + $0x50] sm:$0xf]
  %v44 = vld [vmem:[%s2 + $0x54] sm:$0xff]
  %v45 = vld [vmem:[%s2 + $0x5c] sm:$0xf]
  %v46 = vld [vmem:[%s2 + $0x60] sm:$0xff]
  %v47 = vld [vmem:[%s2 + $0x68] sm:$0xf]
  %v48 = vld [vmem:[%s2 + $0x6c] sm:$0xff]
  %v49 = vld [vmem:[%s2 + $0x74] sm:$0xf]
  %v50 = vld [vmem:[%s2 + $0x78] sm:$0xff]
  %v51 = vld [vmem:[%s2 + $0x80] sm:$0xf]
  %v52 = vld [vmem:[%s2 + $0x84] sm:$0xff]
  %v53 = vld [vmem:[%s2 + $0x8c] sm:$0xf]
  %v54 = vld [vmem:[%s2 + $0x90] sm:$0xff]
  %v55 = vld [vmem:[%s2 + $0x98] sm:$0xf]
  %v56 = vld [vmem:[%s2 + $0x9c] sm:$0xff]
  %v57 = vld [vmem:[%s2 + $0xa4] sm:$0xf]
  %v58 = vld [vmem:[%s2 + $0xa8] sm:$0xff]
  %v59 = vld [vmem:[%s2 + $0xb0] sm:$0xf]
  %v60 = vld [vmem:[%s2 + $0xb4] sm:$0xff]
  %v61 = vld [vmem:[%s2 + $0xbc] sm:$0xf]
  %v62 = vld [vmem:[%s3] sm:$0x1]
  %v63 = vlaneseq
  %v64 = vshrl.u32 %v63, 7
  %s65 = smul.u32 0, 8
  %v66 = vstv %s65
  %v67 = vadd.s32 %v64, %v66
  %s68 = smul.u32 0, 8
  %s69 = sld [smem:[#allocation4 + %s68]]
  %p70 = scmp.eq.s32.totalorder %s69, 0
  // Predicated region
  $region18: #{augmented_gru.1} parent=0 // pred_check
    %p71 = pneg %p70
  $region19: #{augmented_gru.1} parent=0 // pred_check_branch
    %73 = sbr.rel (%p71) target = $region21
  $region20: #{augmented_gru.1} parent=0 // pred_region
    %74 = vst [vmem:[%s4] sm:$0xff] 0.0
    %75 = vst [vmem:[%s4 + $0x8] sm:$0xff] 0.0
    %76 = vst [vmem:[%s4 + $0x10] sm:$0xff] 0.0
    %77 = vst [vmem:[%s4 + $0x18] sm:$0xff] 0.0
    %78 = vst [vmem:[%s4 + $0x20] sm:$0xff] 0.0
    %79 = vst [vmem:[%s4 + $0x28] sm:$0xff] 0.0
    %80 = vst [vmem:[%s4 + $0x30] sm:$0xff] 0.0
    %81 = vst [vmem:[%s4 + $0x38] sm:$0xff] 0.0
  $region21: #{augmented_gru.1} parent=0 // pred_fallthru
    _
  %p82 = scmp.gt.s32.totalorder %s69, 0
  // Predicated region
  $region22: #{augmented_gru.1} parent=0 // pred_check
    %p83 = pneg %p82
  $region23: #{augmented_gru.1} parent=0 // pred_check_branch
    %85 = sbr.rel (%p83) target = $region25
  $region24: #{augmented_gru.1} parent=0 // pred_region
    %v86 = vld [vmem:[#allocation2] sm:$0xff]
    %v87 = vld [vmem:[%s1] sm:$0xff]
    %v88 = vld [vmem:[%s1 + $0x8] sm:$0xff]
    %v89 = vld [vmem:[%s1 + $0x10] sm:$0xff]
    %v90 = vpack.c.bf16 %v86, %v86
    %v123 = vunpack.c.l.b16 %v30
    %v124 = vunpack.c.h.b16 %v30
    %v125 = vunpack.c.l.b16 %v31
    %v126 = vunpack.c.l.b16 %v32
    %v127 = vunpack.c.h.b16 %v32
    %v128 = vunpack.c.l.b16 %v33
    %v129 = vunpack.c.l.b16 %v34
    %v130 = vunpack.c.h.b16 %v34
    %v131 = vunpack.c.l.b16 %v35
    %v132 = vunpack.c.l.b16 %v36
    %v133 = vunpack.c.h.b16 %v36
    %v134 = vunpack.c.l.b16 %v37
    %v135 = vunpack.c.l.b16 %v38
    %v136 = vunpack.c.h.b16 %v38
    %v137 = vunpack.c.l.b16 %v39
    %v138 = vunpack.c.l.b16 %v40
    %v139 = vunpack.c.h.b16 %v40
    %v140 = vunpack.c.l.b16 %v41
    %v141 = vunpack.c.l.b16 %v42
    %v142 = vunpack.c.h.b16 %v42
    %v143 = vunpack.c.l.b16 %v43
    %v144 = vunpack.c.l.b16 %v44
    %v145 = vunpack.c.h.b16 %v44
    %v146 = vunpack.c.l.b16 %v45
    %v147 = vunpack.c.l.b16 %v46
    %v148 = vunpack.c.h.b16 %v46
    %v149 = vunpack.c.l.b16 %v47
    %v150 = vunpack.c.l.b16 %v48
    %v151 = vunpack.c.h.b16 %v48
    %v152 = vunpack.c.l.b16 %v49
    %v153 = vunpack.c.l.b16 %v50
    %v154 = vunpack.c.h.b16 %v50
    %v155 = vunpack.c.l.b16 %v51
    %v156 = vunpack.c.l.b16 %v52
    %v157 = vunpack.c.h.b16 %v52
    %v158 = vunpack.c.l.b16 %v53
    %v159 = vunpack.c.l.b16 %v54
    %v160 = vunpack.c.h.b16 %v54
    %v161 = vunpack.c.l.b16 %v55
    %v162 = vunpack.c.l.b16 %v56
    %v163 = vunpack.c.h.b16 %v56
    %v164 = vunpack.c.l.b16 %v57
    %v165 = vunpack.c.l.b16 %v58
    %v166 = vunpack.c.h.b16 %v58
    %v167 = vunpack.c.l.b16 %v59
    %v168 = vunpack.c.l.b16 %v60
    %v169 = vunpack.c.h.b16 %v60
    %v170 = vunpack.c.l.b16 %v61
    %v171 = vpack.c.b16 %v126, %v123
    %v172 = vpack.c.b16 %v127, %v124
    %v173 = vpack.c.b16 %v128, %v125
    %v174 = vpack.c.b16 %v132, %v129
    %v175 = vpack.c.b16 %v133, %v130
    %v176 = vpack.c.b16 %v134, %v131
    %v177 = vpack.c.b16 %v138, %v135
    %v178 = vpack.c.b16 %v139, %v136
    %v179 = vpack.c.b16 %v140, %v137
    %v180 = vpack.c.b16 %v144, %v141
    %v181 = vpack.c.b16 %v145, %v142
    %v182 = vpack.c.b16 %v146, %v143
    %v183 = vpack.c.b16 %v150, %v147
    %v184 = vpack.c.b16 %v151, %v148
    %v185 = vpack.c.b16 %v152, %v149
    %v186 = vpack.c.b16 %v156, %v153
    %v187 = vpack.c.b16 %v157, %v154
    %v188 = vpack.c.b16 %v158, %v155
    %v189 = vpack.c.b16 %v162, %v159
    %v190 = vpack.c.b16 %v163, %v160
    %v191 = vpack.c.b16 %v164, %v161
    %v192 = vpack.c.b16 %v168, %v165
    %v193 = vpack.c.b16 %v169, %v166
    %v194 = vpack.c.b16 %v170, %v167
    %219 = vmatpush.bf16.msra.mxu0 %v192
    %220 = vmatpush.bf16.msra.mxu0 %v189
    %221 = vmatpush.bf16.msra.mxu0 %v186
    %222 = vmatpush.bf16.msra.mxu0 %v183
    %223 = vmatpush.bf16.msra.mxu0 %v180
    %224 = vmatpush.bf16.msra.mxu0 %v177
    %225 = vmatpush.bf16.msra.mxu0 %v174
    %226 = vmatpush.bf16.msra.mxu0 %v171
    %227 = vmatmul.bf16.gmra.mxu0 %v90
    %v228 = vpop.f32.mrf.mxu0
    %v229 = vadd.f32 0.0, %v228
    %v230 = vpop.f32.mrf.mxu0
    %231 = vdwg.mxu0
    %232 = vmatpush.bf16.msra.mxu0 %v193
    %233 = vmatpush.bf16.msra.mxu0 %v190
    %234 = vmatpush.bf16.msra.mxu0 %v187
    %235 = vmatpush.bf16.msra.mxu0 %v184
    %236 = vmatpush.bf16.msra.mxu0 %v181
    %237 = vmatpush.bf16.msra.mxu0 %v178
    %238 = vmatpush.bf16.msra.mxu0 %v175
    %239 = vmatpush.bf16.msra.mxu0 %v172
    %240 = vmatmul.bf16.gmra.mxu0 %v90
    %v241 = vpop.f32.mrf.mxu0
    %v242 = vadd.f32 0.0, %v241
    %v243 = vpop.f32.mrf.mxu0
    %244 = vdwg.mxu0
    %245 = vmatpush.bf16.msra.mxu0 %v194
    %246 = vmatpush.bf16.msra.mxu0 %v191
    %247 = vmatpush.bf16.msra.mxu0 %v188
    %248 = vmatpush.bf16.msra.mxu0 %v185
    %249 = vmatpush.bf16.msra.mxu0 %v182
    %250 = vmatpush.bf16.msra.mxu0 %v179
    %251 = vmatpush.bf16.msra.mxu0 %v176
    %252 = vmatpush.bf16.msra.mxu0 %v173
    %253 = vmatmul.bf16.gmra.mxu0 %v90
    %v254 = vpop.f32.mrf.mxu0
    %v255 = vadd.f32 0.0, %v254
    %v256 = vpop.f32.mrf.mxu0
    %257 = vdwg.mxu0
    %v258 = vadd.f32 %v87, %v229
    %v259 = vxor.u32 %v258, 2147483648
    %v260 = vmul.f32 %v259, 1.442695
    %v261 = vpow.pop %v260
    %v262 = vadd.f32 %v261, 1.0
    %v263 = vrcp.pop %v262
    %v264 = vmul.f32 %v262, %v263
    %v265 = vsub.f32 1.0, %v264
    %v266 = vmul.f32 %v263, %v265
    %v267 = vadd.f32 %v263, %v266
    %vm268 = vweird.f32 %v262
    %vm269 = vweird.f32 %v263
    %vm270 = vmor %vm268, %vm269
    %v271 = vsel %vm270, %v263, %v267
    %v272 = vand.u32 2147483647, %v262
    %vm273 = vcmp.eq.f32.partialorder %v272, 8.507059e+37
    %v274 = vand.u32 %v262, 2147483648
    %v275 = vor.u32 1.1754944e-38, %v274
    %v276 = vsel %vm273, %v275, %v271
    %v277 = vmul.f32 1.0, %v276
    %v278 = vadd.f32 %v88, %v242
    %v279 = vxor.u32 %v278, 2147483648
    %v280 = vmul.f32 %v279, 1.442695
    %v281 = vpow.pop %v280
    %v282 = vadd.f32 %v281, 1.0
    %v283 = vrcp.pop %v282
    %v284 = vmul.f32 %v282, %v283
    %v285 = vsub.f32 1.0, %v284
    %v286 = vmul.f32 %v283, %v285
    %v287 = vadd.f32 %v283, %v286
    %vm288 = vweird.f32 %v282
    %vm289 = vweird.f32 %v283
    %vm290 = vmor %vm288, %vm289
    %v291 = vsel %vm290, %v283, %v287
    %v292 = vand.u32 2147483647, %v282
    %vm293 = vcmp.eq.f32.partialorder %v292, 8.507059e+37
    %v294 = vand.u32 %v282, 2147483648
    %v295 = vor.u32 1.1754944e-38, %v294
    %v296 = vsel %vm293, %v295, %v291
    %v297 = vmul.f32 1.0, %v296
    %v299 = vperm.slane %v62, 0
    %v301 = vadd.f32 %v255, %v299
    %v302 = vmul.f32 %v277, %v301
    %v303 = vadd.f32 %v89, %v302
    %v304 = vtanh.pop %v303
    %v305 = vsub.f32 1.0, %v297
    %v306 = vmul.f32 %v305, %v304
    %v307 = vmul.f32 %v297, %v86
    %v308 = vadd.f32 %v306, %v307
    %s309 = sld [smem:[#allocation4 + %s68]]
    %v310 = vstv %s309
    %vm311 = vcmp.lt.s32.totalorder %v67, %v310
    %v312 = vsel %vm311, 1, 0
    %vm313 = vcmp.eq.s32.totalorder %v312, 1
    %v314 = vsel %vm313, %v308, 0.0
    %315 = vst [vmem:[%s4] sm:$0xff] %v314
    %v316 = vsel %vm313, %v308, %v86
    %s317 = sadd.s32 %s68, 1
    %s318 = scalar_lea.vmem %s1, 24
    %v319 = vld [vmem:[%s318] sm:$0xff]
    %v320 = vld [vmem:[%s318 + $0x8] sm:$0xff]
    %v321 = vld [vmem:[%s318 + $0x10] sm:$0xff]
    %v322 = vpack.c.bf16 %v316, %v316
    %323 = vmatpush.bf16.msra.mxu0 %v192
    %324 = vmatpush.bf16.msra.mxu0 %v189
    %325 = vmatpush.bf16.msra.mxu0 %v186
    %326 = vmatpush.bf16.msra.mxu0 %v183
    %327 = vmatpush.bf16.msra.mxu0 %v180
    %328 = vmatpush.bf16.msra.mxu0 %v177
    %329 = vmatpush.bf16.msra.mxu0 %v174
    %330 = vmatpush.bf16.msra.mxu0 %v171
    %331 = vmatmul.bf16.gmra.mxu0 %v322
    %v332 = vpop.f32.mrf.mxu0
    %v333 = vadd.f32 0.0, %v332
    %v334 = vpop.f32.mrf.mxu0
    %335 = vdwg.mxu0
    %336 = vmatpush.bf16.msra.mxu0 %v193
    %337 = vmatpush.bf16.msra.mxu0 %v190
    %338 = vmatpush.bf16.msra.mxu0 %v187
    %339 = vmatpush.bf16.msra.mxu0 %v184
    %340 = vmatpush.bf16.msra.mxu0 %v181
    %341 = vmatpush.bf16.msra.mxu0 %v178
    %342 = vmatpush.bf16.msra.mxu0 %v175
    %343 = vmatpush.bf16.msra.mxu0 %v172
    %344 = vmatmul.bf16.gmra.mxu0 %v322
    %v345 = vpop.f32.mrf.mxu0
    %v346 = vadd.f32 0.0, %v345
    %v347 = vpop.f32.mrf.mxu0
    %348 = vdwg.mxu0
    %349 = vmatpush.bf16.msra.mxu0 %v194
    %350 = vmatpush.bf16.msra.mxu0 %v191
    %351 = vmatpush.bf16.msra.mxu0 %v188
    %352 = vmatpush.bf16.msra.mxu0 %v185
    %353 = vmatpush.bf16.msra.mxu0 %v182
    %354 = vmatpush.bf16.msra.mxu0 %v179
    %355 = vmatpush.bf16.msra.mxu0 %v176
    %356 = vmatpush.bf16.msra.mxu0 %v173
    %357 = vmatmul.bf16.gmra.mxu0 %v322
    %v358 = vpop.f32.mrf.mxu0
    %v359 = vadd.f32 0.0, %v358
    %v360 = vpop.f32.mrf.mxu0
    %361 = vdwg.mxu0
    %v362 = vadd.f32 %v319, %v333
    %v363 = vxor.u32 %v362, 2147483648
    %v364 = vmul.f32 %v363, 1.442695
    %v365 = vpow.pop %v364
    %v366 = vadd.f32 %v365, 1.0
    %v367 = vrcp.pop %v366
    %v368 = vmul.f32 %v366, %v367
    %v369 = vsub.f32 1.0, %v368
    %v370 = vmul.f32 %v367, %v369
    %v371 = vadd.f32 %v367, %v370
    %vm372 = vweird.f32 %v366
    %vm373 = vweird.f32 %v367
    %vm374 = vmor %vm372, %vm373
    %v375 = vsel %vm374, %v367, %v371
    %v376 = vand.u32 2147483647, %v366
    %vm377 = vcmp.eq.f32.partialorder %v376, 8.507059e+37
    %v378 = vand.u32 %v366, 2147483648
    %v379 = vor.u32 1.1754944e-38, %v378
    %v380 = vsel %vm377, %v379, %v375
    %v381 = vmul.f32 1.0, %v380
    %v382 = vadd.f32 %v320, %v346
    %v383 = vxor.u32 %v382, 2147483648
    %v384 = vmul.f32 %v383, 1.442695
    %v385 = vpow.pop %v384
    %v386 = vadd.f32 %v385, 1.0
    %v387 = vrcp.pop %v386
    %v388 = vmul.f32 %v386, %v387
    %v389 = vsub.f32 1.0, %v388
    %v390 = vmul.f32 %v387, %v389
    %v391 = vadd.f32 %v387, %v390
    %vm392 = vweird.f32 %v386
    %vm393 = vweird.f32 %v387
    %vm394 = vmor %vm392, %vm393
    %v395 = vsel %vm394, %v387, %v391
    %v396 = vand.u32 2147483647, %v386
    %vm397 = vcmp.eq.f32.partialorder %v396, 8.507059e+37
    %v398 = vand.u32 %v386, 2147483648
    %v399 = vor.u32 1.1754944e-38, %v398
    %v400 = vsel %vm397, %v399, %v395
    %v401 = vmul.f32 1.0, %v400
    %v402 = vadd.f32 %v359, %v299
    %v403 = vmul.f32 %v381, %v402
    %v404 = vadd.f32 %v321, %v403
    %v405 = vtanh.pop %v404
    %v406 = vsub.f32 1.0, %v401
    %v407 = vmul.f32 %v406, %v405
    %v408 = vmul.f32 %v401, %v316
    %v409 = vadd.f32 %v407, %v408
    %s410 = sld [smem:[#allocation4 + %s317]]
    %v411 = vstv %s410
    %vm412 = vcmp.lt.s32.totalorder %v67, %v411
    %v413 = vsel %vm412, 1, 0
    %vm414 = vcmp.eq.s32.totalorder %v413, 1
    %v415 = vsel %vm414, %v409, 0.0
    %s416 = scalar_lea.vmem %s4, 8
    %417 = vst [vmem:[%s416] sm:$0xff] %v415
    %v418 = vsel %vm414, %v409, %v316
    %s419 = sadd.s32 %s68, 2
    %s420 = scalar_lea.vmem %s1, 48
    %v421 = vld [vmem:[%s420] sm:$0xff]
    %v422 = vld [vmem:[%s420 + $0x8] sm:$0xff]
    %v423 = vld [vmem:[%s420 + $0x10] sm:$0xff]
    %v424 = vpack.c.bf16 %v418, %v418
    %425 = vmatpush.bf16.msra.mxu0 %v192
    %426 = vmatpush.bf16.msra.mxu0 %v189
    %427 = vmatpush.bf16.msra.mxu0 %v186
    %428 = vmatpush.bf16.msra.mxu0 %v183
    %429 = vmatpush.bf16.msra.mxu0 %v180
    %430 = vmatpush.bf16.msra.mxu0 %v177
    %431 = vmatpush.bf16.msra.mxu0 %v174
    %432 = vmatpush.bf16.msra.mxu0 %v171
    %433 = vmatmul.bf16.gmra.mxu0 %v424
    %v434 = vpop.f32.mrf.mxu0
    %v435 = vadd.f32 0.0, %v434
    %v436 = vpop.f32.mrf.mxu0
    %437 = vdwg.mxu0
    %438 = vmatpush.bf16.msra.mxu0 %v193
    %439 = vmatpush.bf16.msra.mxu0 %v190
    %440 = vmatpush.bf16.msra.mxu0 %v187
    %441 = vmatpush.bf16.msra.mxu0 %v184
    %442 = vmatpush.bf16.msra.mxu0 %v181
    %443 = vmatpush.bf16.msra.mxu0 %v178
    %444 = vmatpush.bf16.msra.mxu0 %v175
    %445 = vmatpush.bf16.msra.mxu0 %v172
    %446 = vmatmul.bf16.gmra.mxu0 %v424
    %v447 = vpop.f32.mrf.mxu0
    %v448 = vadd.f32 0.0, %v447
    %v449 = vpop.f32.mrf.mxu0
    %450 = vdwg.mxu0
    %451 = vmatpush.bf16.msra.mxu0 %v194
    %452 = vmatpush.bf16.msra.mxu0 %v191
    %453 = vmatpush.bf16.msra.mxu0 %v188
    %454 = vmatpush.bf16.msra.mxu0 %v185
    %455 = vmatpush.bf16.msra.mxu0 %v182
    %456 = vmatpush.bf16.msra.mxu0 %v179
    %457 = vmatpush.bf16.msra.mxu0 %v176
    %458 = vmatpush.bf16.msra.mxu0 %v173
    %459 = vmatmul.bf16.gmra.mxu0 %v424
    %v460 = vpop.f32.mrf.mxu0
    %v461 = vadd.f32 0.0, %v460
    %v462 = vpop.f32.mrf.mxu0
    %463 = vdwg.mxu0
    %v464 = vadd.f32 %v421, %v435
    %v465 = vxor.u32 %v464, 2147483648
    %v466 = vmul.f32 %v465, 1.442695
    %v467 = vpow.pop %v466
    %v468 = vadd.f32 %v467, 1.0
    %v469 = vrcp.pop %v468
    %v470 = vmul.f32 %v468, %v469
    %v471 = vsub.f32 1.0, %v470
    %v472 = vmul.f32 %v469, %v471
    %v473 = vadd.f32 %v469, %v472
    %vm474 = vweird.f32 %v468
    %vm475 = vweird.f32 %v469
    %vm476 = vmor %vm474, %vm475
    %v477 = vsel %vm476, %v469, %v473
    %v478 = vand.u32 2147483647, %v468
    %vm479 = vcmp.eq.f32.partialorder %v478, 8.507059e+37
    %v480 = vand.u32 %v468, 2147483648
    %v481 = vor.u32 1.1754944e-38, %v480
    %v482 = vsel %vm479, %v481, %v477
    %v483 = vmul.f32 1.0, %v482
    %v484 = vadd.f32 %v422, %v448
    %v485 = vxor.u32 %v484, 2147483648
    %v486 = vmul.f32 %v485, 1.442695
    %v487 = vpow.pop %v486
    %v488 = vadd.f32 %v487, 1.0
    %v489 = vrcp.pop %v488
    %v490 = vmul.f32 %v488, %v489
    %v491 = vsub.f32 1.0, %v490
    %v492 = vmul.f32 %v489, %v491
    %v493 = vadd.f32 %v489, %v492
    %vm494 = vweird.f32 %v488
    %vm495 = vweird.f32 %v489
    %vm496 = vmor %vm494, %vm495
    %v497 = vsel %vm496, %v489, %v493
    %v498 = vand.u32 2147483647, %v488
    %vm499 = vcmp.eq.f32.partialorder %v498, 8.507059e+37
    %v500 = vand.u32 %v488, 2147483648
    %v501 = vor.u32 1.1754944e-38, %v500
    %v502 = vsel %vm499, %v501, %v497
    %v503 = vmul.f32 1.0, %v502
    %v504 = vadd.f32 %v461, %v299
    %v505 = vmul.f32 %v483, %v504
    %v506 = vadd.f32 %v423, %v505
    %v507 = vtanh.pop %v506
    %v508 = vsub.f32 1.0, %v503
    %v509 = vmul.f32 %v508, %v507
    %v510 = vmul.f32 %v503, %v418
    %v511 = vadd.f32 %v509, %v510
    %s512 = sld [smem:[#allocation4 + %s419]]
    %v513 = vstv %s512
    %vm514 = vcmp.lt.s32.totalorder %v67, %v513
    %v515 = vsel %vm514, 1, 0
    %vm516 = vcmp.eq.s32.totalorder %v515, 1
    %v517 = vsel %vm516, %v511, 0.0
    %s518 = scalar_lea.vmem %s4, 16
    %519 = vst [vmem:[%s518] sm:$0xff] %v517
    %v520 = vsel %vm516, %v511, %v418
    %s521 = sadd.s32 %s68, 3
    %s522 = scalar_lea.vmem %s1, 72
    %v523 = vld [vmem:[%s522] sm:$0xff]
    %v524 = vld [vmem:[%s522 + $0x8] sm:$0xff]
    %v525 = vld [vmem:[%s522 + $0x10] sm:$0xff]
    %v526 = vpack.c.bf16 %v520, %v520
    %527 = vmatpush.bf16.msra.mxu0 %v192
    %528 = vmatpush.bf16.msra.mxu0 %v189
    %529 = vmatpush.bf16.msra.mxu0 %v186
    %530 = vmatpush.bf16.msra.mxu0 %v183
    %531 = vmatpush.bf16.msra.mxu0 %v180
    %532 = vmatpush.bf16.msra.mxu0 %v177
    %533 = vmatpush.bf16.msra.mxu0 %v174
    %534 = vmatpush.bf16.msra.mxu0 %v171
    %535 = vmatmul.bf16.gmra.mxu0 %v526
    %v536 = vpop.f32.mrf.mxu0
    %v537 = vadd.f32 0.0, %v536
    %v538 = vpop.f32.mrf.mxu0
    %539 = vdwg.mxu0
    %540 = vmatpush.bf16.msra.mxu0 %v193
    %541 = vmatpush.bf16.msra.mxu0 %v190
    %542 = vmatpush.bf16.msra.mxu0 %v187
    %543 = vmatpush.bf16.msra.mxu0 %v184
    %544 = vmatpush.bf16.msra.mxu0 %v181
    %545 = vmatpush.bf16.msra.mxu0 %v178
    %546 = vmatpush.bf16.msra.mxu0 %v175
    %547 = vmatpush.bf16.msra.mxu0 %v172
    %548 = vmatmul.bf16.gmra.mxu0 %v526
    %v549 = vpop.f32.mrf.mxu0
    %v550 = vadd.f32 0.0, %v549
    %v551 = vpop.f32.mrf.mxu0
    %552 = vdwg.mxu0
    %553 = vmatpush.bf16.msra.mxu0 %v194
    %554 = vmatpush.bf16.msra.mxu0 %v191
    %555 = vmatpush.bf16.msra.mxu0 %v188
    %556 = vmatpush.bf16.msra.mxu0 %v185
    %557 = vmatpush.bf16.msra.mxu0 %v182
    %558 = vmatpush.bf16.msra.mxu0 %v179
    %559 = vmatpush.bf16.msra.mxu0 %v176
    %560 = vmatpush.bf16.msra.mxu0 %v173
    %561 = vmatmul.bf16.gmra.mxu0 %v526
    %v562 = vpop.f32.mrf.mxu0
    %v563 = vadd.f32 0.0, %v562
    %v564 = vpop.f32.mrf.mxu0
    %565 = vdwg.mxu0
    %v566 = vadd.f32 %v523, %v537
    %v567 = vxor.u32 %v566, 2147483648
    %v568 = vmul.f32 %v567, 1.442695
    %v569 = vpow.pop %v568
    %v570 = vadd.f32 %v569, 1.0
    %v571 = vrcp.pop %v570
    %v572 = vmul.f32 %v570, %v571
    %v573 = vsub.f32 1.0, %v572
    %v574 = vmul.f32 %v571, %v573
    %v575 = vadd.f32 %v571, %v574
    %vm576 = vweird.f32 %v570
    %vm577 = vweird.f32 %v571
    %vm578 = vmor %vm576, %vm577
    %v579 = vsel %vm578, %v571, %v575
    %v580 = vand.u32 2147483647, %v570
    %vm581 = vcmp.eq.f32.partialorder %v580, 8.507059e+37
    %v582 = vand.u32 %v570, 2147483648
    %v583 = vor.u32 1.1754944e-38, %v582
    %v584 = vsel %vm581, %v583, %v579
    %v585 = vmul.f32 1.0, %v584
    %v586 = vadd.f32 %v524, %v550
    %v587 = vxor.u32 %v586, 2147483648
    %v588 = vmul.f32 %v587, 1.442695
    %v589 = vpow.pop %v588
    %v590 = vadd.f32 %v589, 1.0
    %v591 = vrcp.pop %v590
    %v592 = vmul.f32 %v590, %v591
    %v593 = vsub.f32 1.0, %v592
    %v594 = vmul.f32 %v591, %v593
    %v595 = vadd.f32 %v591, %v594
    %vm596 = vweird.f32 %v590
    %vm597 = vweird.f32 %v591
    %vm598 = vmor %vm596, %vm597
    %v599 = vsel %vm598, %v591, %v595
    %v600 = vand.u32 2147483647, %v590
    %vm601 = vcmp.eq.f32.partialorder %v600, 8.507059e+37
    %v602 = vand.u32 %v590, 2147483648
    %v603 = vor.u32 1.1754944e-38, %v602
    %v604 = vsel %vm601, %v603, %v599
    %v605 = vmul.f32 1.0, %v604
    %v606 = vadd.f32 %v563, %v299
    %v607 = vmul.f32 %v585, %v606
    %v608 = vadd.f32 %v525, %v607
    %v609 = vtanh.pop %v608
    %v610 = vsub.f32 1.0, %v605
    %v611 = vmul.f32 %v610, %v609
    %v612 = vmul.f32 %v605, %v520
    %v613 = vadd.f32 %v611, %v612
    %s614 = sld [smem:[#allocation4 + %s521]]
    %v615 = vstv %s614
    %vm616 = vcmp.lt.s32.totalorder %v67, %v615
    %v617 = vsel %vm616, 1, 0
    %vm618 = vcmp.eq.s32.totalorder %v617, 1
    %v619 = vsel %vm618, %v613, 0.0
    %s620 = scalar_lea.vmem %s4, 24
    %621 = vst [vmem:[%s620] sm:$0xff] %v619
    %v622 = vsel %vm618, %v613, %v520
    %s623 = sadd.s32 %s68, 4
    %s624 = scalar_lea.vmem %s1, 96
    %v625 = vld [vmem:[%s624] sm:$0xff]
    %v626 = vld [vmem:[%s624 + $0x8] sm:$0xff]
    %v627 = vld [vmem:[%s624 + $0x10] sm:$0xff]
    %v628 = vpack.c.bf16 %v622, %v622
    %629 = vmatpush.bf16.msra.mxu0 %v192
    %630 = vmatpush.bf16.msra.mxu0 %v189
    %631 = vmatpush.bf16.msra.mxu0 %v186
    %632 = vmatpush.bf16.msra.mxu0 %v183
    %633 = vmatpush.bf16.msra.mxu0 %v180
    %634 = vmatpush.bf16.msra.mxu0 %v177
    %635 = vmatpush.bf16.msra.mxu0 %v174
    %636 = vmatpush.bf16.msra.mxu0 %v171
    %637 = vmatmul.bf16.gmra.mxu0 %v628
    %v638 = vpop.f32.mrf.mxu0
    %v639 = vadd.f32 0.0, %v638
    %v640 = vpop.f32.mrf.mxu0
    %641 = vdwg.mxu0
    %642 = vmatpush.bf16.msra.mxu0 %v193
    %643 = vmatpush.bf16.msra.mxu0 %v190
    %644 = vmatpush.bf16.msra.mxu0 %v187
    %645 = vmatpush.bf16.msra.mxu0 %v184
    %646 = vmatpush.bf16.msra.mxu0 %v181
    %647 = vmatpush.bf16.msra.mxu0 %v178
    %648 = vmatpush.bf16.msra.mxu0 %v175
    %649 = vmatpush.bf16.msra.mxu0 %v172
    %650 = vmatmul.bf16.gmra.mxu0 %v628
    %v651 = vpop.f32.mrf.mxu0
    %v652 = vadd.f32 0.0, %v651
    %v653 = vpop.f32.mrf.mxu0
    %654 = vdwg.mxu0
    %655 = vmatpush.bf16.msra.mxu0 %v194
    %656 = vmatpush.bf16.msra.mxu0 %v191
    %657 = vmatpush.bf16.msra.mxu0 %v188
    %658 = vmatpush.bf16.msra.mxu0 %v185
    %659 = vmatpush.bf16.msra.mxu0 %v182
    %660 = vmatpush.bf16.msra.mxu0 %v179
    %661 = vmatpush.bf16.msra.mxu0 %v176
    %662 = vmatpush.bf16.msra.mxu0 %v173
    %663 = vmatmul.bf16.gmra.mxu0 %v628
    %v664 = vpop.f32.mrf.mxu0
    %v665 = vadd.f32 0.0, %v664
    %v666 = vpop.f32.mrf.mxu0
    %667 = vdwg.mxu0
    %v668 = vadd.f32 %v625, %v639
    %v669 = vxor.u32 %v668, 2147483648
    %v670 = vmul.f32 %v669, 1.442695
    %v671 = vpow.pop %v670
    %v672 = vadd.f32 %v671, 1.0
    %v673 = vrcp.pop %v672
    %v674 = vmul.f32 %v672, %v673
    %v675 = vsub.f32 1.0, %v674
    %v676 = vmul.f32 %v673, %v675
    %v677 = vadd.f32 %v673, %v676
    %vm678 = vweird.f32 %v672
    %vm679 = vweird.f32 %v673
    %vm680 = vmor %vm678, %vm679
    %v681 = vsel %vm680, %v673, %v677
    %v682 = vand.u32 2147483647, %v672
    %vm683 = vcmp.eq.f32.partialorder %v682, 8.507059e+37
    %v684 = vand.u32 %v672, 2147483648
    %v685 = vor.u32 1.1754944e-38, %v684
    %v686 = vsel %vm683, %v685, %v681
    %v687 = vmul.f32 1.0, %v686
    %v688 = vadd.f32 %v626, %v652
    %v689 = vxor.u32 %v688, 2147483648
    %v690 = vmul.f32 %v689, 1.442695
    %v691 = vpow.pop %v690
    %v692 = vadd.f32 %v691, 1.0
    %v693 = vrcp.pop %v692
    %v694 = vmul.f32 %v692, %v693
    %v695 = vsub.f32 1.0, %v694
    %v696 = vmul.f32 %v693, %v695
    %v697 = vadd.f32 %v693, %v696
    %vm698 = vweird.f32 %v692
    %vm699 = vweird.f32 %v693
    %vm700 = vmor %vm698, %vm699
    %v701 = vsel %vm700, %v693, %v697
    %v702 = vand.u32 2147483647, %v692
    %vm703 = vcmp.eq.f32.partialorder %v702, 8.507059e+37
    %v704 = vand.u32 %v692, 2147483648
    %v705 = vor.u32 1.1754944e-38, %v704
    %v706 = vsel %vm703, %v705, %v701
    %v707 = vmul.f32 1.0, %v706
    %v708 = vadd.f32 %v665, %v299
    %v709 = vmul.f32 %v687, %v708
    %v710 = vadd.f32 %v627, %v709
    %v711 = vtanh.pop %v710
    %v712 = vsub.f32 1.0, %v707
    %v713 = vmul.f32 %v712, %v711
    %v714 = vmul.f32 %v707, %v622
    %v715 = vadd.f32 %v713, %v714
    %s716 = sld [smem:[#allocation4 + %s623]]
    %v717 = vstv %s716
    %vm718 = vcmp.lt.s32.totalorder %v67, %v717
    %v719 = vsel %vm718, 1, 0
    %vm720 = vcmp.eq.s32.totalorder %v719, 1
    %v721 = vsel %vm720, %v715, 0.0
    %s722 = scalar_lea.vmem %s4, 32
    %723 = vst [vmem:[%s722] sm:$0xff] %v721
    %v724 = vsel %vm720, %v715, %v622
    %s725 = sadd.s32 %s68, 5
    %s726 = scalar_lea.vmem %s1, 120
    %v727 = vld [vmem:[%s726] sm:$0xff]
    %v728 = vld [vmem:[%s726 + $0x8] sm:$0xff]
    %v729 = vld [vmem:[%s726 + $0x10] sm:$0xff]
    %v730 = vpack.c.bf16 %v724, %v724
    %731 = vmatpush.bf16.msra.mxu0 %v192
    %732 = vmatpush.bf16.msra.mxu0 %v189
    %733 = vmatpush.bf16.msra.mxu0 %v186
    %734 = vmatpush.bf16.msra.mxu0 %v183
    %735 = vmatpush.bf16.msra.mxu0 %v180
    %736 = vmatpush.bf16.msra.mxu0 %v177
    %737 = vmatpush.bf16.msra.mxu0 %v174
    %738 = vmatpush.bf16.msra.mxu0 %v171
    %739 = vmatmul.bf16.gmra.mxu0 %v730
    %v740 = vpop.f32.mrf.mxu0
    %v741 = vadd.f32 0.0, %v740
    %v742 = vpop.f32.mrf.mxu0
    %743 = vdwg.mxu0
    %744 = vmatpush.bf16.msra.mxu0 %v193
    %745 = vmatpush.bf16.msra.mxu0 %v190
    %746 = vmatpush.bf16.msra.mxu0 %v187
    %747 = vmatpush.bf16.msra.mxu0 %v184
    %748 = vmatpush.bf16.msra.mxu0 %v181
    %749 = vmatpush.bf16.msra.mxu0 %v178
    %750 = vmatpush.bf16.msra.mxu0 %v175
    %751 = vmatpush.bf16.msra.mxu0 %v172
    %752 = vmatmul.bf16.gmra.mxu0 %v730
    %v753 = vpop.f32.mrf.mxu0
    %v754 = vadd.f32 0.0, %v753
    %v755 = vpop.f32.mrf.mxu0
    %756 = vdwg.mxu0
    %757 = vmatpush.bf16.msra.mxu0 %v194
    %758 = vmatpush.bf16.msra.mxu0 %v191
    %759 = vmatpush.bf16.msra.mxu0 %v188
    %760 = vmatpush.bf16.msra.mxu0 %v185
    %761 = vmatpush.bf16.msra.mxu0 %v182
    %762 = vmatpush.bf16.msra.mxu0 %v179
    %763 = vmatpush.bf16.msra.mxu0 %v176
    %764 = vmatpush.bf16.msra.mxu0 %v173
    %765 = vmatmul.bf16.gmra.mxu0 %v730
    %v766 = vpop.f32.mrf.mxu0
    %v767 = vadd.f32 0.0, %v766
    %v768 = vpop.f32.mrf.mxu0
    %769 = vdwg.mxu0
    %v770 = vadd.f32 %v727, %v741
    %v771 = vxor.u32 %v770, 2147483648
    %v772 = vmul.f32 %v771, 1.442695
    %v773 = vpow.pop %v772
    %v774 = vadd.f32 %v773, 1.0
    %v775 = vrcp.pop %v774
    %v776 = vmul.f32 %v774, %v775
    %v777 = vsub.f32 1.0, %v776
    %v778 = vmul.f32 %v775, %v777
    %v779 = vadd.f32 %v775, %v778
    %vm780 = vweird.f32 %v774
    %vm781 = vweird.f32 %v775
    %vm782 = vmor %vm780, %vm781
    %v783 = vsel %vm782, %v775, %v779
    %v784 = vand.u32 2147483647, %v774
    %vm785 = vcmp.eq.f32.partialorder %v784, 8.507059e+37
    %v786 = vand.u32 %v774, 2147483648
    %v787 = vor.u32 1.1754944e-38, %v786
    %v788 = vsel %vm785, %v787, %v783
    %v789 = vmul.f32 1.0, %v788
    %v790 = vadd.f32 %v728, %v754
    %v791 = vxor.u32 %v790, 2147483648
    %v792 = vmul.f32 %v791, 1.442695
    %v793 = vpow.pop %v792
    %v794 = vadd.f32 %v793, 1.0
    %v795 = vrcp.pop %v794
    %v796 = vmul.f32 %v794, %v795
    %v797 = vsub.f32 1.0, %v796
    %v798 = vmul.f32 %v795, %v797
    %v799 = vadd.f32 %v795, %v798
    %vm800 = vweird.f32 %v794
    %vm801 = vweird.f32 %v795
    %vm802 = vmor %vm800, %vm801
    %v803 = vsel %vm802, %v795, %v799
    %v804 = vand.u32 2147483647, %v794
    %vm805 = vcmp.eq.f32.partialorder %v804, 8.507059e+37
    %v806 = vand.u32 %v794, 2147483648
    %v807 = vor.u32 1.1754944e-38, %v806
    %v808 = vsel %vm805, %v807, %v803
    %v809 = vmul.f32 1.0, %v808
    %v810 = vadd.f32 %v767, %v299
    %v811 = vmul.f32 %v789, %v810
    %v812 = vadd.f32 %v729, %v811
    %v813 = vtanh.pop %v812
    %v814 = vsub.f32 1.0, %v809
    %v815 = vmul.f32 %v814, %v813
    %v816 = vmul.f32 %v809, %v724
    %v817 = vadd.f32 %v815, %v816
    %s818 = sld [smem:[#allocation4 + %s725]]
    %v819 = vstv %s818
    %vm820 = vcmp.lt.s32.totalorder %v67, %v819
    %v821 = vsel %vm820, 1, 0
    %vm822 = vcmp.eq.s32.totalorder %v821, 1
    %v823 = vsel %vm822, %v817, 0.0
    %s824 = scalar_lea.vmem %s4, 40
    %825 = vst [vmem:[%s824] sm:$0xff] %v823
    %v826 = vsel %vm822, %v817, %v724
    %s827 = sadd.s32 %s68, 6
    %s828 = scalar_lea.vmem %s1, 144
    %v829 = vld [vmem:[%s828] sm:$0xff]
    %v830 = vld [vmem:[%s828 + $0x8] sm:$0xff]
    %v831 = vld [vmem:[%s828 + $0x10] sm:$0xff]
    %v832 = vpack.c.bf16 %v826, %v826
    %833 = vmatpush.bf16.msra.mxu0 %v192
    %834 = vmatpush.bf16.msra.mxu0 %v189
    %835 = vmatpush.bf16.msra.mxu0 %v186
    %836 = vmatpush.bf16.msra.mxu0 %v183
    %837 = vmatpush.bf16.msra.mxu0 %v180
    %838 = vmatpush.bf16.msra.mxu0 %v177
    %839 = vmatpush.bf16.msra.mxu0 %v174
    %840 = vmatpush.bf16.msra.mxu0 %v171
    %841 = vmatmul.bf16.gmra.mxu0 %v832
    %v842 = vpop.f32.mrf.mxu0
    %v843 = vadd.f32 0.0, %v842
    %v844 = vpop.f32.mrf.mxu0
    %845 = vdwg.mxu0
    %846 = vmatpush.bf16.msra.mxu0 %v193
    %847 = vmatpush.bf16.msra.mxu0 %v190
    %848 = vmatpush.bf16.msra.mxu0 %v187
    %849 = vmatpush.bf16.msra.mxu0 %v184
    %850 = vmatpush.bf16.msra.mxu0 %v181
    %851 = vmatpush.bf16.msra.mxu0 %v178
    %852 = vmatpush.bf16.msra.mxu0 %v175
    %853 = vmatpush.bf16.msra.mxu0 %v172
    %854 = vmatmul.bf16.gmra.mxu0 %v832
    %v855 = vpop.f32.mrf.mxu0
    %v856 = vadd.f32 0.0, %v855
    %v857 = vpop.f32.mrf.mxu0
    %858 = vdwg.mxu0
    %859 = vmatpush.bf16.msra.mxu0 %v194
    %860 = vmatpush.bf16.msra.mxu0 %v191
    %861 = vmatpush.bf16.msra.mxu0 %v188
    %862 = vmatpush.bf16.msra.mxu0 %v185
    %863 = vmatpush.bf16.msra.mxu0 %v182
    %864 = vmatpush.bf16.msra.mxu0 %v179
    %865 = vmatpush.bf16.msra.mxu0 %v176
    %866 = vmatpush.bf16.msra.mxu0 %v173
    %867 = vmatmul.bf16.gmra.mxu0 %v832
    %v868 = vpop.f32.mrf.mxu0
    %v869 = vadd.f32 0.0, %v868
    %v870 = vpop.f32.mrf.mxu0
    %871 = vdwg.mxu0
    %v872 = vadd.f32 %v829, %v843
    %v873 = vxor.u32 %v872, 2147483648
    %v874 = vmul.f32 %v873, 1.442695
    %v875 = vpow.pop %v874
    %v876 = vadd.f32 %v875, 1.0
    %v877 = vrcp.pop %v876
    %v878 = vmul.f32 %v876, %v877
    %v879 = vsub.f32 1.0, %v878
    %v880 = vmul.f32 %v877, %v879
    %v881 = vadd.f32 %v877, %v880
    %vm882 = vweird.f32 %v876
    %vm883 = vweird.f32 %v877
    %vm884 = vmor %vm882, %vm883
    %v885 = vsel %vm884, %v877, %v881
    %v886 = vand.u32 2147483647, %v876
    %vm887 = vcmp.eq.f32.partialorder %v886, 8.507059e+37
    %v888 = vand.u32 %v876, 2147483648
    %v889 = vor.u32 1.1754944e-38, %v888
    %v890 = vsel %vm887, %v889, %v885
    %v891 = vmul.f32 1.0, %v890
    %v892 = vadd.f32 %v830, %v856
    %v893 = vxor.u32 %v892, 2147483648
    %v894 = vmul.f32 %v893, 1.442695
    %v895 = vpow.pop %v894
    %v896 = vadd.f32 %v895, 1.0
    %v897 = vrcp.pop %v896
    %v898 = vmul.f32 %v896, %v897
    %v899 = vsub.f32 1.0, %v898
    %v900 = vmul.f32 %v897, %v899
    %v901 = vadd.f32 %v897, %v900
    %vm902 = vweird.f32 %v896
    %vm903 = vweird.f32 %v897
    %vm904 = vmor %vm902, %vm903
    %v905 = vsel %vm904, %v897, %v901
    %v906 = vand.u32 2147483647, %v896
    %vm907 = vcmp.eq.f32.partialorder %v906, 8.507059e+37
    %v908 = vand.u32 %v896, 2147483648
    %v909 = vor.u32 1.1754944e-38, %v908
    %v910 = vsel %vm907, %v909, %v905
    %v911 = vmul.f32 1.0, %v910
    %v912 = vadd.f32 %v869, %v299
    %v913 = vmul.f32 %v891, %v912
    %v914 = vadd.f32 %v831, %v913
    %v915 = vtanh.pop %v914
    %v916 = vsub.f32 1.0, %v911
    %v917 = vmul.f32 %v916, %v915
    %v918 = vmul.f32 %v911, %v826
    %v919 = vadd.f32 %v917, %v918
    %s920 = sld [smem:[#allocation4 + %s827]]
    %v921 = vstv %s920
    %vm922 = vcmp.lt.s32.totalorder %v67, %v921
    %v923 = vsel %vm922, 1, 0
    %vm924 = vcmp.eq.s32.totalorder %v923, 1
    %v925 = vsel %vm924, %v919, 0.0
    %s926 = scalar_lea.vmem %s4, 48
    %927 = vst [vmem:[%s926] sm:$0xff] %v925
    %v928 = vsel %vm924, %v919, %v826
    %s929 = sadd.s32 %s68, 7
    %s930 = scalar_lea.vmem %s1, 168
    %v931 = vld [vmem:[%s930] sm:$0xff]
    %v932 = vld [vmem:[%s930 + $0x8] sm:$0xff]
    %v933 = vld [vmem:[%s930 + $0x10] sm:$0xff]
    %v934 = vpack.c.bf16 %v928, %v928
    %935 = vmatpush.bf16.msra.mxu0 %v192
    %936 = vmatpush.bf16.msra.mxu0 %v189
    %937 = vmatpush.bf16.msra.mxu0 %v186
    %938 = vmatpush.bf16.msra.mxu0 %v183
    %939 = vmatpush.bf16.msra.mxu0 %v180
    %940 = vmatpush.bf16.msra.mxu0 %v177
    %941 = vmatpush.bf16.msra.mxu0 %v174
    %942 = vmatpush.bf16.msra.mxu0 %v171
    %943 = vmatmul.bf16.gmra.mxu0 %v934
    %v944 = vpop.f32.mrf.mxu0
    %v945 = vadd.f32 0.0, %v944
    %v946 = vpop.f32.mrf.mxu0
    %947 = vdwg.mxu0
    %948 = vmatpush.bf16.msra.mxu0 %v193
    %949 = vmatpush.bf16.msra.mxu0 %v190
    %950 = vmatpush.bf16.msra.mxu0 %v187
    %951 = vmatpush.bf16.msra.mxu0 %v184
    %952 = vmatpush.bf16.msra.mxu0 %v181
    %953 = vmatpush.bf16.msra.mxu0 %v178
    %954 = vmatpush.bf16.msra.mxu0 %v175
    %955 = vmatpush.bf16.msra.mxu0 %v172
    %956 = vmatmul.bf16.gmra.mxu0 %v934
    %v957 = vpop.f32.mrf.mxu0
    %v958 = vadd.f32 0.0, %v957
    %v959 = vpop.f32.mrf.mxu0
    %960 = vdwg.mxu0
    %961 = vmatpush.bf16.msra.mxu0 %v194
    %962 = vmatpush.bf16.msra.mxu0 %v191
    %963 = vmatpush.bf16.msra.mxu0 %v188
    %964 = vmatpush.bf16.msra.mxu0 %v185
    %965 = vmatpush.bf16.msra.mxu0 %v182
    %966 = vmatpush.bf16.msra.mxu0 %v179
    %967 = vmatpush.bf16.msra.mxu0 %v176
    %968 = vmatpush.bf16.msra.mxu0 %v173
    %969 = vmatmul.bf16.gmra.mxu0 %v934
    %v970 = vpop.f32.mrf.mxu0
    %v971 = vadd.f32 0.0, %v970
    %v972 = vpop.f32.mrf.mxu0
    %973 = vdwg.mxu0
    %v974 = vadd.f32 %v931, %v945
    %v975 = vxor.u32 %v974, 2147483648
    %v976 = vmul.f32 %v975, 1.442695
    %v977 = vpow.pop %v976
    %v978 = vadd.f32 %v977, 1.0
    %v979 = vrcp.pop %v978
    %v980 = vmul.f32 %v978, %v979
    %v981 = vsub.f32 1.0, %v980
    %v982 = vmul.f32 %v979, %v981
    %v983 = vadd.f32 %v979, %v982
    %vm984 = vweird.f32 %v978
    %vm985 = vweird.f32 %v979
    %vm986 = vmor %vm984, %vm985
    %v987 = vsel %vm986, %v979, %v983
    %v988 = vand.u32 2147483647, %v978
    %vm989 = vcmp.eq.f32.partialorder %v988, 8.507059e+37
    %v990 = vand.u32 %v978, 2147483648
    %v991 = vor.u32 1.1754944e-38, %v990
    %v992 = vsel %vm989, %v991, %v987
    %v993 = vmul.f32 1.0, %v992
    %v994 = vadd.f32 %v932, %v958
    %v995 = vxor.u32 %v994, 2147483648
    %v996 = vmul.f32 %v995, 1.442695
    %v997 = vpow.pop %v996
    %v998 = vadd.f32 %v997, 1.0
    %v999 = vrcp.pop %v998
    %v1000 = vmul.f32 %v998, %v999
    %v1001 = vsub.f32 1.0, %v1000
    %v1002 = vmul.f32 %v999, %v1001
    %v1003 = vadd.f32 %v999, %v1002
    %vm1004 = vweird.f32 %v998
    %vm1005 = vweird.f32 %v999
    %vm1006 = vmor %vm1004, %vm1005
    %v1007 = vsel %vm1006, %v999, %v1003
    %v1008 = vand.u32 2147483647, %v998
    %vm1009 = vcmp.eq.f32.partialorder %v1008, 8.507059e+37
    %v1010 = vand.u32 %v998, 2147483648
    %v1011 = vor.u32 1.1754944e-38, %v1010
    %v1012 = vsel %vm1009, %v1011, %v1007
    %v1013 = vmul.f32 1.0, %v1012
    %v1014 = vadd.f32 %v971, %v299
    %v1015 = vmul.f32 %v993, %v1014
    %v1016 = vadd.f32 %v933, %v1015
    %v1017 = vtanh.pop %v1016
    %v1018 = vsub.f32 1.0, %v1013
    %v1019 = vmul.f32 %v1018, %v1017
    %v1020 = vmul.f32 %v1013, %v928
    %v1021 = vadd.f32 %v1019, %v1020
    %s1022 = sld [smem:[#allocation4 + %s929]]
    %v1023 = vstv %s1022
    %vm1024 = vcmp.lt.s32.totalorder %v67, %v1023
    %v1025 = vsel %vm1024, 1, 0
    %vm1026 = vcmp.eq.s32.totalorder %v1025, 1
    %v1027 = vsel %vm1026, %v1021, 0.0
    %s1028 = scalar_lea.vmem %s4, 56
    %1029 = vst [vmem:[%s1028] sm:$0xff] %v1027
    %v1030 = vsel %vm1026, %v1021, %v928
    %1031 = vst [vmem:[#allocation2] sm:$0xff] %v1030
  $region25: #{augmented_gru.1} parent=0 // pred_fallthru
    _
  // Predicated region
  $region26: #{augmented_gru.1} parent=0 // pred_check
    %p1032 = pneg %p25
  $region27: #{augmented_gru.1} parent=0 // pred_check_branch
    %1034 = sbr.rel (%p1032) target = $region29
  $region28: #{augmented_gru.1} parent=0 // pred_region
    %v1035 = vld [vmem:[#allocation2] sm:$0xff]
    %1036 = vst [vmem:[%s5] sm:$0xff] %v1035
  $region29: #{augmented_gru.1} parent=0 // pred_fallthru
    _
  // Predicated region
  $region30: #{augmented_gru.1} parent=0 // pred_check
    _
  $region31: #{augmented_gru.1} parent=0 // pred_check_branch
    %1038 = sbr.rel (0) target = $region33
  $region32: #{augmented_gru.1} parent=0 // pred_region
    _
  $region33: #{augmented_gru.1} parent=0 // pred_fallthru
    _
  // Predicated region
  $region34: #{augmented_gru.1} parent=0 // pred_check
    _
  $region35: #{augmented_gru.1} parent=0 // pred_check_branch
    %1040 = sbr.rel (0) target = $region37
  $region36: #{augmented_gru.1} parent=0 // pred_region
    _
  $region37: #{augmented_gru.1} parent=0 // pred_fallthru
    _
  // Predicated region
  $region38: #{augmented_gru.1} parent=0 // pred_check
    _
  $region39: #{augmented_gru.1} parent=0 // pred_check_branch
    %1042 = sbr.rel (0) target = $region41
  $region40: #{augmented_gru.1} parent=0 // pred_region
    _
  $region41: #{augmented_gru.1} parent=0 // pred_fallthru
    _
  // Predicated region
  $region42: #{augmented_gru.1} parent=0 // pred_check
    _
  $region43: #{augmented_gru.1} parent=0 // pred_check_branch
    %1044 = sbr.rel (0) target = $region45
  $region44: #{augmented_gru.1} parent=0 // pred_region
    _
  $region45: #{augmented_gru.1} parent=0 // pred_fallthru
    _

</llo_original>
